<compile_context>
chip_gen: v7x
topology: tpu7x:2x2x1
jax: 0.10.0
libtpu: 0.0.40
codegen_flags: <defaults>
</compile_context>

<pallas_src>
import functools

import jax
import jax.numpy as jnp
from jax import lax
from jax.experimental import pallas as pl
from jax.experimental.pallas import tpu as pltpu


def _round_up(x: int, m: int) -> int:
    return ((x + m - 1) // m) * m


def _make_recommender_kernel(v_actual: int, v_padded: int, tile_v: int):
    """Builds the kernel; vocab-padding mask is baked in only when needed."""

    def kernel(ctx_ref, w_in_ref, w_out_ref, e_ref, out_ref, q_sc, m_sc, l_sc):
        p = pl.program_id(1)   # 0: streaming-stats pass, 1: normalize/write pass
        v = pl.program_id(2)   # vocab tile index

        @pl.when((p == 0) & (v == 0))
        def _init():
            # Algebraic collapse: q = (ctx_emb @ W_in) @ W_out^T  -> (TB, D).
            # Batch-tile invariant across the vocab sweep: compute once, keep in VMEM.
            ct = jnp.dot(ctx_ref[...], w_in_ref[...],
                         preferred_element_type=jnp.float32)              # (TB, H)
            q = lax.dot_general(ct, w_out_ref[...],
                                dimension_numbers=(((1,), (1,)), ((), ())),
                                preferred_element_type=jnp.float32)       # (TB, D)
            q_sc[...] = q.astype(q_sc.dtype)                              # bf16 for the MXU
            m_sc[...] = jnp.full_like(m_sc, -jnp.inf)
            l_sc[...] = jnp.zeros_like(l_sc)

        # logits tile = q @ E_tile^T, contracting dim 1 of BOTH operands so the
        # MXU consumes E untransposed (no XLU transpose copy). bf16 x bf16 -> f32.
        logits = lax.dot_general(q_sc[...], e_ref[...],
                                 dimension_numbers=(((1,), (1,)), ((), ())),
                                 preferred_element_type=jnp.float32)      # (TB, TV)

        if v_padded != v_actual:
            # Mask zero-padded vocab columns so they never contribute to the
            # softmax statistics (exp(-inf) -> 0 in both passes).  Trace-time
            # conditional: costs nothing when V is already tile-aligned.
            col = v * tile_v + lax.broadcasted_iota(jnp.int32, logits.shape, 1)
            logits = jnp.where(col < v_actual, logits, -jnp.inf)

        @pl.when(p == 0)
        def _stats():
            # Online softmax statistics over the streamed vocab tiles.
            m_prev = m_sc[...]
            m_new = jnp.maximum(m_prev, jnp.max(logits, axis=1, keepdims=True))
            l_sc[...] = (l_sc[...] * jnp.exp(m_prev - m_new)
                         + jnp.sum(jnp.exp(logits - m_new), axis=1, keepdims=True))
            m_sc[...] = m_new

        @pl.when(p == 1)
        def _normalize():
            # EUP approximate reciprocal instead of a VALU divide sequence.
            probs = jnp.exp(logits - m_sc[...]) * pl.reciprocal(l_sc[...], approx=True)
            out_ref[...] = probs.astype(out_ref.dtype)

    return kernel


@functools.partial(jax.jit, static_argnames=("tile_b", "tile_v"))
def recommender_forward(context, embedding_table, w_in, w_out,
                        *, tile_b=128, tile_v=1024):
    """context: int32 (B,) indices. Returns softmax probabilities (B, V), f32."""
    # Embedding gather (nn.Embedding lookup) as wrapper glue.
    # TODO(synk): for very large B the gather could move in-kernel via
    #             PrefetchScalarGridSpec + pl.Element row indexing; at these
    #             sizes the (B, D) round trip is negligible vs the (B, V) output.
    ctx_emb = jnp.take(embedding_table, context, axis=0)                   # (B, D) f32

    B, D = ctx_emb.shape
    V = embedding_table.shape[0]
    H = w_in.shape[1]

    # Tile / padding bookkeeping: batch padded with zero rows, vocab padded with
    # zero embedding rows (masked to -inf inside the kernel).
    tile_b = min(tile_b, _round_up(B, 8))
    tile_v = min(tile_v, _round_up(V, 128))
    b_pad = _round_up(B, tile_b)
    v_pad = _round_up(V, tile_v)

    if b_pad != B:
        ctx_emb = jnp.pad(ctx_emb, ((0, b_pad - B), (0, 0)))
    # bf16 operands for the HBM- and MXU-heavy logits path; accumulation stays f32.
    e_bf16 = embedding_table.astype(jnp.bfloat16)                          # (V, D)
    if v_pad != V:
        e_bf16 = jnp.pad(e_bf16, ((0, v_pad - V), (0, 0)))

    grid = (b_pad // tile_b, 2, v_pad // tile_v)   # (batch tiles, pass, vocab tiles)

    grid_spec = pltpu.PrefetchScalarGridSpec(
        num_scalar_prefetch=0,
        grid=grid,
        in_specs=[
            pl.BlockSpec((tile_b, D), lambda i, p, v: (i, 0)),   # ctx_emb (resident per batch tile)
            pl.BlockSpec((D, H),      lambda i, p, v: (0, 0)),   # W_in    (resident)
            pl.BlockSpec((D, H),      lambda i, p, v: (0, 0)),   # W_out   (resident)
            pl.BlockSpec((tile_v, D), lambda i, p, v: (v, 0)),   # E tile  (streamed)
        ],
        # Pass 0 parks the (unwritten) output on vocab-block 0 (stays resident, no
        # mid-pass flush); pass 1 walks the vocab blocks once -> output written once.
        out_specs=pl.BlockSpec((tile_b, tile_v), lambda i, p, v: (i, v * p)),
        scratch_shapes=[
            pltpu.VMEM((tile_b, D), jnp.bfloat16),   # q = (ctx @ W_in) @ W_out^T
            pltpu.VMEM((tile_b, 1), jnp.float32),    # running max
            pltpu.VMEM((tile_b, 1), jnp.float32),    # running sum-exp
        ],
    )

    out = pl.pallas_call(
        _make_recommender_kernel(V, v_pad, tile_v),
        out_shape=jax.ShapeDtypeStruct((b_pad, v_pad), jnp.float32),
        grid_spec=grid_spec,
        compiler_params=pltpu.CompilerParams(
            # Batch tiles are independent -> megacore shards them; the pass and
            # vocab (softmax reduction) axes carry scratch state -> arbitrary.
            dimension_semantics=("parallel", "arbitrary", "arbitrary"),
            # Explicit budget, safe on v5e/v6e (128 MiB) and v7x (64 MiB) VMEM.
            vmem_limit_bytes=32 * 1024 * 1024,
        ),
    )(ctx_emb, w_in, w_out, e_bf16)

    return out[:B, :V]


if __name__ == "__main__":
    # Small deterministic synthetic setup.  B and V are deliberately NOT tile
    # aligned so the padding + in-kernel vocab mask paths are exercised, and
    # tile_v=128 forces the multi-tile online-softmax path (2 vocab tiles).
    V, D, H, B = 200, 32, 128, 100   # vocab, embed dim, hidden (=128 in module), batch

    key = jax.random.PRNGKey(0)
    k_vec, k_in, k_out, k_ctx = jax.random.split(key, 4)

    # "pretrained" embedding vectors (frozen in the module)
    vectors = jax.random.normal(k_vec, (V, D), dtype=jnp.float32)

    # xavier_normal_ init for the two (D, 128) parameters
    xavier_std = (2.0 / (D + H)) ** 0.5
    w_in = jax.random.normal(k_in, (D, H), dtype=jnp.float32) * xavier_std
    w_out = jax.random.normal(k_out, (D, H), dtype=jnp.float32) * xavier_std

    # context token indices
    context = jax.random.randint(k_ctx, (B,), 0, V, dtype=jnp.int32)

    out = recommender_forward(context, vectors, w_in, w_out, tile_v=128)
    out = jax.block_until_ready(out)

    # Pure-JAX reference mirroring the PyTorch module (all f32).
    ctx_emb = jnp.take(vectors, context, axis=0)
    ref = jax.nn.softmax((ctx_emb @ w_in) @ (vectors @ w_out).T, axis=1)

    assert out.shape == (B, V)
    row_sums = jnp.sum(out, axis=1)
    # rows are valid probability distributions (approx reciprocal -> loose-ish tol)
    assert bool(jnp.all(jnp.abs(row_sums - 1.0) < 1e-2)), float(jnp.max(jnp.abs(row_sums - 1.0)))
    # matches the f32 module semantics up to bf16-operand rounding of the logits
    assert bool(jnp.max(jnp.abs(out - ref)) < 7.5e-2), float(jnp.max(jnp.abs(out - ref)))

    print("KERNEL_OK")
</pallas_src>

<mosaic_0001>
module attributes {stable_mosaic.version = 11 : i64} {
  func.func @kernel(%arg0: i32, %arg1: i32, %arg2: i32, %arg3: memref<104x32xf32, #tpu.memory_space<vmem>>, %arg4: memref<32x128xf32, #tpu.memory_space<vmem>>, %arg5: memref<32x128xf32, #tpu.memory_space<vmem>>, %arg6: memref<128x32xbf16, #tpu.memory_space<vmem>>, %arg7: memref<104x128xf32, #tpu.memory_space<vmem>>, %arg8: memref<104x32xbf16, #tpu.memory_space<vmem>>, %arg9: memref<104x1xf32, #tpu.memory_space<vmem>>, %arg10: memref<104x1xf32, #tpu.memory_space<vmem>>) attributes {dimension_semantics = [#tpu.dimension_semantics<parallel>, #tpu.dimension_semantics<arbitrary>, #tpu.dimension_semantics<arbitrary>], iteration_bounds = array<i64: 1, 2, 2>, scalar_prefetch = 0 : i64, scratch_operands = 3 : i64, tpu.core_type = #tpu.core_type<tc>, window_params = [{transform_indices = @transform_0, window_bounds = array<i64: 104, 32>}, {pipeline_mode = #tpu.pipeline_mode<synchronous>, transform_indices = @transform_1, window_bounds = array<i64: 32, 128>}, {pipeline_mode = #tpu.pipeline_mode<synchronous>, transform_indices = @transform_2, window_bounds = array<i64: 32, 128>}, {transform_indices = @transform_3, window_bounds = array<i64: 128, 32>}, {transform_indices = @transform_4, window_bounds = array<i64: 104, 128>}]} {
    %c0_i32 = arith.constant 0 : i32
    %0 = arith.cmpi eq, %arg1, %c0_i32 : i32
    %c0_i32_0 = arith.constant 0 : i32
    %1 = arith.cmpi eq, %arg2, %c0_i32_0 : i32
    %2 = arith.andi %0, %1 : i1
    %3 = arith.extui %2 : i1 to i32
    %c0_i32_1 = arith.constant 0 : i32
    %4 = arith.cmpi ne, %3, %c0_i32_1 : i32
    scf.if %4 {
      %c0_9 = arith.constant 0 : index
      %c0_10 = arith.constant 0 : index
      %22 = vector.load %arg3[%c0_9, %c0_10] : memref<104x32xf32, #tpu.memory_space<vmem>>, vector<104x32xf32>
      %c0_11 = arith.constant 0 : index
      %c0_12 = arith.constant 0 : index
      %23 = vector.load %arg4[%c0_11, %c0_12] : memref<32x128xf32, #tpu.memory_space<vmem>>, vector<32x128xf32>
      %cst_13 = arith.constant dense<0.000000e+00> : vector<104x128xf32>
      %24 = tpu.matmul %22, %23, %cst_13 {dimension_numbers = #tpu.dot_dimension_numbers<[1], [0], [0], [1], [0, 0, 1, 1], [], []>} : vector<104x32xf32>, vector<32x128xf32>, vector<104x128xf32> -> vector<104x128xf32>
      %c0_14 = arith.constant 0 : index
      %c0_15 = arith.constant 0 : index
      %25 = vector.load %arg5[%c0_14, %c0_15] : memref<32x128xf32, #tpu.memory_space<vmem>>, vector<32x128xf32>
      %cst_16 = arith.constant dense<0.000000e+00> : vector<104x32xf32>
      %26 = tpu.matmul %24, %25, %cst_16 {dimension_numbers = #tpu.dot_dimension_numbers<[1], [1], [0], [0], [0, 0, 1, 0], [], []>} : vector<104x128xf32>, vector<32x128xf32>, vector<104x32xf32> -> vector<104x32xf32>
      %27 = arith.truncf %26 : vector<104x32xf32> to vector<104x32xbf16>
      %c0_17 = arith.constant 0 : index
      %c0_18 = arith.constant 0 : index
      %28 = vector.load %arg8[%c0_17, %c0_18] : memref<104x32xbf16, #tpu.memory_space<vmem>>, vector<104x32xbf16>
      tpu.vector_store %arg8[%c0_17, %c0_18], %27 {strides = array<i32>} : memref<104x32xbf16, #tpu.memory_space<vmem>>, vector<104x32xbf16>,
      %cst_19 = arith.constant 0xFF800000 : f32
      %29 = vector.broadcast %cst_19 : f32 to vector<104x1xf32>
      %c0_20 = arith.constant 0 : index
      %c0_21 = arith.constant 0 : index
      %30 = vector.load %arg9[%c0_20, %c0_21] : memref<104x1xf32, #tpu.memory_space<vmem>>, vector<104x1xf32>
      tpu.vector_store %arg9[%c0_20, %c0_21], %29 {strides = array<i32>} : memref<104x1xf32, #tpu.memory_space<vmem>>, vector<104x1xf32>,
      %cst_22 = arith.constant 0.000000e+00 : f32
      %31 = vector.broadcast %cst_22 : f32 to vector<104x1xf32>
      %c0_23 = arith.constant 0 : index
      %c0_24 = arith.constant 0 : index
      %32 = vector.load %arg10[%c0_23, %c0_24] : memref<104x1xf32, #tpu.memory_space<vmem>>, vector<104x1xf32>
      tpu.vector_store %arg10[%c0_23, %c0_24], %31 {strides = array<i32>} : memref<104x1xf32, #tpu.memory_space<vmem>>, vector<104x1xf32>,
    } else {
    }
    %c0 = arith.constant 0 : index
    %c0_2 = arith.constant 0 : index
    %5 = vector.load %arg8[%c0, %c0_2] : memref<104x32xbf16, #tpu.memory_space<vmem>>, vector<104x32xbf16>
    %c0_3 = arith.constant 0 : index
    %c0_4 = arith.constant 0 : index
    %6 = vector.load %arg6[%c0_3, %c0_4] : memref<128x32xbf16, #tpu.memory_space<vmem>>, vector<128x32xbf16>
    %cst = arith.constant dense<0.000000e+00> : vector<104x128xf32>
    %7 = tpu.matmul %5, %6, %cst {dimension_numbers = #tpu.dot_dimension_numbers<[1], [1], [0], [0], [0, 0, 1, 0], [], []>} : vector<104x32xbf16>, vector<128x32xbf16>, vector<104x128xf32> -> vector<104x128xf32>
    %c128_i32 = arith.constant 128 : i32
    %8 = arith.muli %arg2, %c128_i32 : i32
    %9 = tpu.iota {dimensions = array<i32: 1>} : vector<104x128xi32>
    %10 = vector.broadcast %8 : i32 to vector<104x128xi32>
    %11 = arith.addi %10, %9 : vector<104x128xi32>
    %c200_i32 = arith.constant 200 : i32
    %12 = vector.broadcast %c200_i32 : i32 to vector<104x128xi32>
    %13 = arith.cmpi slt, %11, %12 : vector<104x128xi32>
    %cst_5 = arith.constant 0xFF800000 : f32
    %14 = vector.broadcast %cst_5 : f32 to vector<104x128xf32>
    %15 = arith.select %13, %7, %14 : vector<104x128xi1>, vector<104x128xf32>
    %c0_i32_6 = arith.constant 0 : i32
    %16 = arith.cmpi eq, %arg1, %c0_i32_6 : i32
    %17 = arith.extui %16 : i1 to i32
    %c0_i32_7 = arith.constant 0 : i32
    %18 = arith.cmpi ne, %17, %c0_i32_7 : i32
    scf.if %18 {
      %c0_9 = arith.constant 0 : index
      %c0_10 = arith.constant 0 : index
      %22 = vector.load %arg9[%c0_9, %c0_10] : memref<104x1xf32, #tpu.memory_space<vmem>>, vector<104x1xf32>
      %cst_11 = arith.constant dense<0xFF800000> : vector<104xf32>
      %23 = vector.multi_reduction <maximumf>, %15, %cst_11 [1] : vector<104x128xf32> to vector<104xf32>
      %24 = vector.shape_cast %23 : vector<104xf32> to vector<104x1xf32>
      %25 = arith.maximumf %22, %24 : vector<104x1xf32>
      %c0_12 = arith.constant 0 : index
      %c0_13 = arith.constant 0 : index
      %26 = vector.load %arg10[%c0_12, %c0_13] : memref<104x1xf32, #tpu.memory_space<vmem>>, vector<104x1xf32>
      %27 = arith.subf %22, %25 : vector<104x1xf32>
      %28 = math.exp %27 : vector<104x1xf32>
      %29 = arith.mulf %26, %28 : vector<104x1xf32>
      %30 = vector.broadcast %25 : vector<104x1xf32> to vector<104x128xf32>
      %31 = arith.subf %15, %30 : vector<104x128xf32>
      %32 = math.exp %31 : vector<104x128xf32>
      %cst_14 = arith.constant dense<0.000000e+00> : vector<104xf32>
      %33 = vector.multi_reduction <add>, %32, %cst_14 [1] : vector<104x128xf32> to vector<104xf32>
      %34 = vector.shape_cast %33 : vector<104xf32> to vector<104x1xf32>
      %35 = arith.addf %29, %34 : vector<104x1xf32>
      %c0_15 = arith.constant 0 : index
      %c0_16 = arith.constant 0 : index
      %36 = vector.load %arg10[%c0_15, %c0_16] : memref<104x1xf32, #tpu.memory_space<vmem>>, vector<104x1xf32>
      tpu.vector_store %arg10[%c0_15, %c0_16], %35 {strides = array<i32>} : memref<104x1xf32, #tpu.memory_space<vmem>>, vector<104x1xf32>,
      %c0_17 = arith.constant 0 : index
      %c0_18 = arith.constant 0 : index
      %37 = vector.load %arg9[%c0_17, %c0_18] : memref<104x1xf32, #tpu.memory_space<vmem>>, vector<104x1xf32>
      tpu.vector_store %arg9[%c0_17, %c0_18], %25 {strides = array<i32>} : memref<104x1xf32, #tpu.memory_space<vmem>>, vector<104x1xf32>,
    } else {
    }
    %c1_i32 = arith.constant 1 : i32
    %19 = arith.cmpi eq, %arg1, %c1_i32 : i32
    %20 = arith.extui %19 : i1 to i32
    %c0_i32_8 = arith.constant 0 : i32
    %21 = arith.cmpi ne, %20, %c0_i32_8 : i32
    scf.if %21 {
      %c0_9 = arith.constant 0 : index
      %c0_10 = arith.constant 0 : index
      %22 = vector.load %arg9[%c0_9, %c0_10] : memref<104x1xf32, #tpu.memory_space<vmem>>, vector<104x1xf32>
      %23 = vector.broadcast %22 : vector<104x1xf32> to vector<104x128xf32>
      %24 = arith.subf %15, %23 : vector<104x128xf32>
      %25 = math.exp %24 : vector<104x128xf32>
      %c0_11 = arith.constant 0 : index
      %c0_12 = arith.constant 0 : index
      %26 = vector.load %arg10[%c0_11, %c0_12] : memref<104x1xf32, #tpu.memory_space<vmem>>, vector<104x1xf32>
      %27 = tpu.reciprocal %26 {approx = true} : vector<104x1xf32> -> vector<104x1xf32>
      %28 = vector.broadcast %27 : vector<104x1xf32> to vector<104x128xf32>
      %29 = arith.mulf %25, %28 : vector<104x128xf32>
      %c0_13 = arith.constant 0 : index
      %c0_14 = arith.constant 0 : index
      %30 = vector.load %arg7[%c0_13, %c0_14] : memref<104x128xf32, #tpu.memory_space<vmem>>, vector<104x128xf32>
      tpu.vector_store %arg7[%c0_13, %c0_14], %29 {strides = array<i32>} : memref<104x128xf32, #tpu.memory_space<vmem>>, vector<104x128xf32>,
    } else {
    }
    return
  }
  func.func @transform_0(%arg0: i32, %arg1: i32, %arg2: i32) -> (i32, i32) {
    %c0_i32 = arith.constant 0 : i32
    %c0_i32_0 = arith.constant 0 : i32
    return %arg0, %c0_i32 : i32, i32
  }
  func.func @transform_1(%arg0: i32, %arg1: i32, %arg2: i32) -> (i32, i32) {
    %c0_i32 = arith.constant 0 : i32
    %c0_i32_0 = arith.constant 0 : i32
    %c0_i32_1 = arith.constant 0 : i32
    return %c0_i32, %c0_i32_0 : i32, i32
  }
  func.func @transform_2(%arg0: i32, %arg1: i32, %arg2: i32) -> (i32, i32) {
    %c0_i32 = arith.constant 0 : i32
    %c0_i32_0 = arith.constant 0 : i32
    %c0_i32_1 = arith.constant 0 : i32
    return %c0_i32, %c0_i32_0 : i32, i32
  }
  func.func @transform_3(%arg0: i32, %arg1: i32, %arg2: i32) -> (i32, i32) {
    %c0_i32 = arith.constant 0 : i32
    %c0_i32_0 = arith.constant 0 : i32
    return %arg2, %c0_i32 : i32, i32
  }
  func.func @transform_4(%arg0: i32, %arg1: i32, %arg2: i32) -> (i32, i32) {
    %0 = arith.muli %arg2, %arg1 : i32
    %c0_i32 = arith.constant 0 : i32
    return %arg0, %0 : i32, i32
  }
}

</mosaic_0001>

<llo_original>
// kernel: recommender_forward.1
$region0: #{recommender_forward.1}
  #allocation0 [shape = 'u32[]', space=smem, size = 0x4, offset = 0x4, fixed_abs, tag = 'smem constant byte address 0x4 - core index']
  #allocation1 [shape = 'u32[144,128]{1,0:T(1,128)}', space=vmem, size = 0x12000, scoped, tag = 'internal scratch']
  #allocation2 [shape = 'bf16[104,32]{1,0:T(8,128)(2,1)}', space=vmem, size = 0x6800, scoped, tag = 'scratch operand']
  #allocation3 [shape = 'f32[104,1]{1,0:T(8,128)}', space=vmem, size = 0xd000, scoped, tag = 'scratch operand']
  #allocation4 [shape = 'f32[104,1]{1,0:T(8,128)}', space=vmem, size = 0xd000, scoped, tag = 'scratch operand']
  %s0 = inlined_call_operand.vmem [shape: f32[104,32], index: 0, kind: input, shape index: {}]
  %s1 = inlined_call_operand.vmem [shape: f32[32,128], index: 1, kind: input, shape index: {}]
  %s2 = inlined_call_operand.vmem [shape: f32[32,128], index: 2, kind: input, shape index: {}]
  %s3 = inlined_call_operand.vmem [shape: bf16[256,32], index: 3, kind: input, shape index: {}]
  %s4 = inlined_call_operand.vmem [shape: f32[104,256], index: 4, kind: output, shape index: {}]
  %s5 = sld [smem:[#allocation0]]
  $region95: #{recommender_forward.1} parent=0
    _
  %s7 = ssub.s32 1, %s5
  %s8 = scalar_select 0, %s7, %s5
  $region1: #{recommender_forward.1} parent=0
    #allocation5 [shape = 'u8[106496]{0}', space=vmem, size = 0x1a000, scoped, tag = 'output window, operand 0']
    loop: start=0, step=1, limit=6
    $region2: #{recommender_forward.1} parent=1 // loop_pre_header
      _
    $region3: #{recommender_forward.1} parent=1 // loop_header
      %s10 = sphi 0, %s14
      %p11 = scmp.ge.s32.totalorder %s10, 6
      %s17 = sphi 0, %s36
      %s18 = sphi 0, %s32
      %s19 = sphi 0, %s28
      %s20 = sphi 0, %s17
      %s21 = sphi 0, %s18
      %s22 = sphi 0, %s19
      %s23 = sphi 0, %s20
      %s24 = sphi 0, %s21
      %s25 = sphi 0, %s22
      %s39 = sphi 0, %s41
      %s42 = sphi 0, %s39
      %s43 = sphi 0, %s42
      %s59 = sphi 0, %s43
      %s63 = sphi 0, %s63
      %s65 = sphi 0, %s63
      %s66 = sphi 0, %s65
      %s80 = sphi 0, %s66
      %s84 = sphi 0, %s84
      %s86 = sphi 0, %s84
      %s87 = sphi 0, %s86
      %s101 = sphi 0, %s87
      %s107 = sphi 0, %s109
      %s110 = sphi 0, %s107
      %s111 = sphi 0, %s110
      %s127 = sphi 0, %s111
      %s137 = sphi 0, %s139
      %s140 = sphi 0, %s137
      %s141 = sphi 0, %s140
      %s157 = sphi 0, %s141
    $region4: #{recommender_forward.1} parent=1 // loop_header_branch
      %13 = sbr.rel (%p11) target = $region8
    $region5: #{recommender_forward.1} parent=1 // loop_body
      %s15 = ssub.s32 %s10, 1
      %s16 = ssub.s32 %s10, 2
      %s26 = sadd.s32 1, %s19
      %p27 = scmp.ge.s32.totalorder %s26, 2
      %s28 = scalar_select %p27, 0, %s26
      %s29 = sadd.s32 1, %s18
      %s30 = scalar_select %p27, %s29, %s18
      %p31 = scmp.ge.s32.totalorder %s30, 2
      %s32 = scalar_select %p31, 0, %s30
      %s33 = sadd.s32 1, %s17
      %s34 = scalar_select %p31, %s33, %s17
      %p35 = scmp.ge.s32.totalorder %s34, 1
      %s36 = scalar_select %p35, 0, %s34
      %s37 = ssub.s32 %s17, %s36
      %p38 = scmp.eq.s32.totalorder %s37, 0
      %s40 = sadd.s32 %s39, 1
      %s41 = scalar_select %p38, %s39, %s40
      %p44 = pneg %p38
      %p45 = scmp.eq.s32.totalorder %s10, 3
      %p46 = por %p44, %p45
      %p47 = scmp.ne.s32.totalorder %s39, %s42
      %p48 = scmp.eq.s32.totalorder %s10, 0
      %p49 = por %p47, %p48
      %p50 = scmp.ne.s32.totalorder %s39, %s42
      %p51 = scmp.eq.s32.totalorder %s15, 3
      %p52 = por %p50, %p51
      %p53 = scmp.ne.s32.totalorder %s42, %s43
      %p54 = scmp.eq.s32.totalorder %s15, 0
      %p55 = por %p53, %p54
      %p56 = scmp.ne.s32.totalorder %s42, %s43
      %p57 = scmp.eq.s32.totalorder %s16, 3
      %p58 = por %p56, %p57
      %p60 = scmp.ne.s32.totalorder %s43, %s59
      %p61 = scmp.eq.s32.totalorder %s16, 0
      %p62 = por %p60, %p61
      %s64 = sadd.s32 %s63, 1
      %p67 = scmp.eq.s32.totalorder %s10, 3
      %p68 = scmp.ne.s32.totalorder %s63, %s65
      %p69 = scmp.eq.s32.totalorder %s10, 0
      %p70 = por %p68, %p69
      %p71 = scmp.ne.s32.totalorder %s63, %s65
      %p72 = scmp.eq.s32.totalorder %s15, 3
      %p73 = por %p71, %p72
      %p74 = scmp.ne.s32.totalorder %s65, %s66
      %p75 = scmp.eq.s32.totalorder %s15, 0
      %p76 = por %p74, %p75
      %p77 = scmp.ne.s32.totalorder %s65, %s66
      %p78 = scmp.eq.s32.totalorder %s16, 3
      %p79 = por %p77, %p78
      %p81 = scmp.ne.s32.totalorder %s66, %s80
      %p82 = scmp.eq.s32.totalorder %s16, 0
      %p83 = por %p81, %p82
      %s85 = sadd.s32 %s84, 1
      %p88 = scmp.eq.s32.totalorder %s10, 3
      %p89 = scmp.ne.s32.totalorder %s84, %s86
      %p90 = scmp.eq.s32.totalorder %s10, 0
      %p91 = por %p89, %p90
      %p92 = scmp.ne.s32.totalorder %s84, %s86
      %p93 = scmp.eq.s32.totalorder %s15, 3
      %p94 = por %p92, %p93
      %p95 = scmp.ne.s32.totalorder %s86, %s87
      %p96 = scmp.eq.s32.totalorder %s15, 0
      %p97 = por %p95, %p96
      %p98 = scmp.ne.s32.totalorder %s86, %s87
      %p99 = scmp.eq.s32.totalorder %s16, 3
      %p100 = por %p98, %p99
      %p102 = scmp.ne.s32.totalorder %s87, %s101
      %p103 = scmp.eq.s32.totalorder %s16, 0
      %p104 = por %p102, %p103
      %s105 = ssub.s32 %s19, %s28
      %p106 = scmp.eq.s32.totalorder %s105, 0
      %s108 = sadd.s32 %s107, 1
      %s109 = scalar_select %p106, %s107, %s108
      %p112 = pneg %p106
      %p113 = scmp.eq.s32.totalorder %s10, 3
      %p114 = por %p112, %p113
      %p115 = scmp.ne.s32.totalorder %s107, %s110
      %p116 = scmp.eq.s32.totalorder %s10, 0
      %p117 = por %p115, %p116
      %p118 = scmp.ne.s32.totalorder %s107, %s110
      %p119 = scmp.eq.s32.totalorder %s15, 3
      %p120 = por %p118, %p119
      %p121 = scmp.ne.s32.totalorder %s110, %s111
      %p122 = scmp.eq.s32.totalorder %s15, 0
      %p123 = por %p121, %p122
      %p124 = scmp.ne.s32.totalorder %s110, %s111
      %p125 = scmp.eq.s32.totalorder %s16, 3
      %p126 = por %p124, %p125
      %p128 = scmp.ne.s32.totalorder %s111, %s127
      %p129 = scmp.eq.s32.totalorder %s16, 0
      %p130 = por %p128, %p129
      %s131 = smul.u32 %s19, %s18
      %s132 = smul.u32 %s28, %s32
      %s133 = ssub.s32 %s17, %s36
      %s134 = ssub.s32 %s131, %s132
      %s135 = sor.u32 %s133, %s134
      %p136 = scmp.eq.s32.totalorder %s135, 0
      %s138 = sadd.s32 %s137, 1
      %s139 = scalar_select %p136, %s137, %s138
      %p142 = pneg %p136
      %p143 = scmp.eq.s32.totalorder %s10, 3
      %p144 = por %p142, %p143
      %p145 = scmp.ne.s32.totalorder %s137, %s140
      %p146 = scmp.eq.s32.totalorder %s10, 0
      %p147 = por %p145, %p146
      %p148 = scmp.ne.s32.totalorder %s137, %s140
      %p149 = scmp.eq.s32.totalorder %s15, 3
      %p150 = por %p148, %p149
      %p151 = scmp.ne.s32.totalorder %s140, %s141
      %p152 = scmp.eq.s32.totalorder %s15, 0
      %p153 = por %p151, %p152
      %p154 = scmp.ne.s32.totalorder %s140, %s141
      %p155 = scmp.eq.s32.totalorder %s16, 3
      %p156 = por %p154, %p155
      %p158 = scmp.ne.s32.totalorder %s141, %s157
      %p159 = scmp.eq.s32.totalorder %s16, 0
      %p160 = por %p158, %p159
      %p161 = scmp.le.s32.totalorder 1, %s10
      %p162 = scmp.lt.s32.totalorder %s10, 5
      %p163 = pnand %p161, %p162
      %p164 = pneg %p163
      // Predicated region
      $region9: #{recommender_forward.1} parent=5 // pred_check
        _
      $region10: #{recommender_forward.1} parent=5 // pred_check_branch
        %166 = sbr.rel (%p163) target = $region12
      $region11: #{recommender_forward.1} parent=5 // pred_region
        %s167 = ssub.s32 %s10, 1
        // Predicated region
        $region13: #{recommender_forward.1} parent=11 // pred_check
          %p168 = pneg %p55
        $region14: #{recommender_forward.1} parent=11 // pred_check_branch
          %170 = sbr.rel (%p168) target = $region16
        $region15: #{recommender_forward.1} parent=11 // pred_region
          %s171 = smul.u32 13, %s20
          %p172 = scmp.lt.s32.totalorder %s171, 12
          %s173 = scalar_select %p172, %s171, 12
          %s174 = smul.addr %s173, 8
          %s175 = scalar_lea.vmem %s0, %s174
          %s176 = smul.u32 13, %s20
        $region16: #{recommender_forward.1} parent=11 // pred_fallthru
          _
        // Predicated region
        $region17: #{recommender_forward.1} parent=11 // pred_check
          %p177 = pneg %p76
        $region18: #{recommender_forward.1} parent=11 // pred_check_branch
          %179 = sbr.rel (%p177) target = $region20
        $region19: #{recommender_forward.1} parent=11 // pred_region
          _
        $region20: #{recommender_forward.1} parent=11 // pred_fallthru
          _
        // Predicated region
        $region21: #{recommender_forward.1} parent=11 // pred_check
          %p180 = pneg %p97
        $region22: #{recommender_forward.1} parent=11 // pred_check_branch
          %182 = sbr.rel (%p180) target = $region24
        $region23: #{recommender_forward.1} parent=11 // pred_region
          _
        $region24: #{recommender_forward.1} parent=11 // pred_fallthru
          _
      $region12: #{recommender_forward.1} parent=5 // pred_fallthru
        _
      %p183 = scmp.lt.s32.totalorder %s10, 4
      // Predicated region
      $region25: #{recommender_forward.1} parent=5 // pred_check
        %p184 = pneg %p183
      $region26: #{recommender_forward.1} parent=5 // pred_check_branch
        %186 = sbr.rel (%p184) target = $region28
      $region27: #{recommender_forward.1} parent=5 // pred_region
        // Predicated region
        $region29: #{recommender_forward.1} parent=27 // pred_check
          %p187 = pneg %p117
        $region30: #{recommender_forward.1} parent=27 // pred_check_branch
          %189 = sbr.rel (%p187) target = $region32
        $region31: #{recommender_forward.1} parent=27 // pred_region
          %s190 = smul.u32 16, %s19
          %p191 = scmp.lt.s32.totalorder %s190, 31
          %s192 = scalar_select %p191, %s190, 31
          %s193 = smul.addr %s192, 4
          %s194 = scalar_lea.vmem %s3, %s193
          %s195 = smul.u32 16, %s19
        $region32: #{recommender_forward.1} parent=27 // pred_fallthru
          _
      $region28: #{recommender_forward.1} parent=5 // pred_fallthru
        _
      %p196 = scmp.le.s32.totalorder 1, %s10
      %p197 = scmp.lt.s32.totalorder %s10, 5
      %p198 = pnand %p196, %p197
      %p199 = pneg %p198
      // Predicated region
      $region33: #{recommender_forward.1} parent=5 // pred_check
        _
      $region34: #{recommender_forward.1} parent=5 // pred_check_branch
        %201 = sbr.rel (%p198) target = $region36
      $region35: #{recommender_forward.1} parent=5 // pred_region
        %s202 = ssub.s32 %s10, 1
        %s203 = smul.u32 13, %s20
        %p204 = scmp.lt.s32.totalorder %s203, 12
        %s205 = scalar_select %p204, %s203, 12
        %s206 = smul.addr %s205, 8
        %s207 = scalar_lea.vmem %s0, %s206
        %p208 = pneg %p55
        %p209 = pneg %p52
        %p210 = pneg %p76
        %p211 = pneg %p73
        %p212 = pneg %p97
        %p213 = pneg %p94
        %s214 = smul.u32 16, %s22
        %p215 = scmp.lt.s32.totalorder %s214, 31
        %s216 = scalar_select %p215, %s214, 31
        %s217 = smul.addr %s216, 4
        %s218 = scalar_lea.vmem %s3, %s217
        %p219 = pneg %p123
        %p220 = pneg %p120
        %p221 = pneg %p153
        %p222 = pneg %p150
        %s223 = sand.u32 %s140, 1
        %s224 = sand.u32 %s140, 1
        %s225 = smul.addr %s224, 104
        %s226 = scalar_lea.vmem [#allocation5], %s225
        %s227 = smul.u32 13, %s20
        %p228 = scmp.lt.s32.totalorder %s227, 12
        %s229 = scalar_select %p228, %s227, 12
        %s230 = smul.addr %s229, 8
        %s231 = scalar_lea.vmem %s0, %s230
        %s232 = smul.u32 13, %s20
        %s233 = smul.u32 16, %s22
        %p234 = scmp.lt.s32.totalorder %s233, 31
        %s235 = scalar_select %p234, %s233, 31
        %s236 = smul.addr %s235, 4
        %s237 = scalar_lea.vmem %s3, %s236
        %s238 = smul.u32 16, %s22
        %s239 = smul.u32 %s22, %s21
        %s240 = smul.u32 13, %s20
        %p242 = scmp.eq.s32.totalorder %s21, 0
        %p243 = scmp.eq.s32.totalorder %s22, 0
        %p244 = pnand %p242, %p243
        %p245 = pneg %p244
        // Predicated region
        $region37: #{recommender_forward.1} parent=35 // pred_check
          _
        $region38: #{recommender_forward.1} parent=35 // pred_check_branch
          %247 = sbr.rel (%p244) target = $region40
        $region39: #{recommender_forward.1} parent=35 // pred_region
          %v248 = vld [vmem:[%s231] sm:$0xff]
          %v249 = vld [vmem:[%s231 + $0x8] sm:$0xff]
          %v250 = vld [vmem:[%s231 + $0x10] sm:$0xff]
          %v251 = vld [vmem:[%s231 + $0x18] sm:$0xff]
          %v252 = vld [vmem:[%s231 + $0x20] sm:$0xff]
          %v253 = vld [vmem:[%s231 + $0x28] sm:$0xff]
          %v254 = vld [vmem:[%s231 + $0x30] sm:$0xff]
          %v255 = vld [vmem:[%s231 + $0x38] sm:$0xff]
          %v256 = vld [vmem:[%s231 + $0x40] sm:$0xff]
          %v257 = vld [vmem:[%s231 + $0x48] sm:$0xff]
          %v258 = vld [vmem:[%s231 + $0x50] sm:$0xff]
          %v259 = vld [vmem:[%s231 + $0x58] sm:$0xff]
          %v260 = vld [vmem:[%s231 + $0x60] sm:$0xff]
          %v261 = vld [vmem:[%s1] sm:$0xff]
          %v262 = vld [vmem:[%s1 + $0x8] sm:$0xff]
          %v263 = vld [vmem:[%s1 + $0x10] sm:$0xff]
          %v264 = vld [vmem:[%s1 + $0x18] sm:$0xff]
          %vm265 = vcmask 261120
          %v267 = vsel %vm265, %v248, 0
          %v270 = vsel %vm265, %v249, 0
          %v273 = vsel %vm265, %v250, 0
          %v276 = vsel %vm265, %v251, 0
          %v279 = vsel %vm265, %v252, 0
          %v282 = vsel %vm265, %v253, 0
          %v285 = vsel %vm265, %v254, 0
          %v288 = vsel %vm265, %v255, 0
          %v291 = vsel %vm265, %v256, 0
          %v294 = vsel %vm265, %v257, 0
          %v297 = vsel %vm265, %v258, 0
          %v300 = vsel %vm265, %v259, 0
          %v303 = vsel %vm265, %v260, 0
          %305 = vmatprep.subr.mxu0 0.0
          %306 = vmatpush1.msra.mxu0 %v261
          %307 = vmatprep.subr.mxu0 0.0
          %308 = vmatpush1.msra.mxu0 %v262
          %309 = vmatprep.subr.mxu0 0.0
          %310 = vmatpush1.msra.mxu0 %v263
          %311 = vmatprep.subr.mxu0 0.0
          %312 = vmatpush1.msra.mxu0 %v264
          %313 = vmatprep.subr.mxu0 0.0
          %314 = vmatpush1.msra.mxu0 0.0
          %315 = vmatprep.subr.mxu0 0.0
          %316 = vmatpush1.msra.mxu0 0.0
          %317 = vmatprep.subr.mxu0 0.0
          %318 = vmatpush1.msra.mxu0 0.0
          %319 = vmatprep.subr.mxu0 0.0
          %320 = vmatpush1.msra.mxu0 0.0
          %321 = vmatprep.subr.mxu0 0.0
          %322 = vmatpush1.msra.mxu0 0.0
          %323 = vmatprep.subr.mxu0 0.0
          %324 = vmatpush1.msra.mxu0 0.0
          %325 = vmatprep.subr.mxu0 0.0
          %326 = vmatpush1.msra.mxu0 0.0
          %327 = vmatprep.subr.mxu0 0.0
          %328 = vmatpush1.msra.mxu0 0.0
          %329 = vmatprep.subr.mxu0 0.0
          %330 = vmatpush1.msra.mxu0 0.0
          %331 = vmatprep.subr.mxu0 0.0
          %332 = vmatpush1.msra.mxu0 0.0
          %333 = vmatprep.subr.mxu0 0.0
          %334 = vmatpush1.msra.mxu0 0.0
          %335 = vmatprep.subr.mxu0 0.0
          %336 = vmatpush1.msra.mxu0 0.0
          %337 = vmatprep.subr.mxu0 0.0
          %338 = vmatpush1.msra.mxu0 0.0
          %339 = vmatprep.subr.mxu0 0.0
          %340 = vmatpush1.msra.mxu0 0.0
          %341 = vmatprep.subr.mxu0 0.0
          %342 = vmatpush1.msra.mxu0 0.0
          %343 = vmatprep.subr.mxu0 0.0
          %344 = vmatpush1.msra.mxu0 0.0
          %345 = vmatprep.subr.mxu0 0.0
          %346 = vmatpush1.msra.mxu0 0.0
          %347 = vmatprep.subr.mxu0 0.0
          %348 = vmatpush1.msra.mxu0 0.0
          %349 = vmatprep.subr.mxu0 0.0
          %350 = vmatpush1.msra.mxu0 0.0
          %351 = vmatprep.subr.mxu0 0.0
          %352 = vmatpush1.msra.mxu0 0.0
          %353 = vmatprep.subr.mxu0 0.0
          %354 = vmatpush1.msra.mxu0 0.0
          %355 = vmatprep.subr.mxu0 0.0
          %356 = vmatpush1.msra.mxu0 0.0
          %357 = vmatprep.subr.mxu0 0.0
          %358 = vmatpush1.msra.mxu0 0.0
          %359 = vmatprep.subr.mxu0 0.0
          %360 = vmatpush1.msra.mxu0 0.0
          %361 = vmatprep.subr.mxu0 0.0
          %362 = vmatpush1.msra.mxu0 0.0
          %363 = vmatprep.subr.mxu0 0.0
          %364 = vmatpush1.msra.mxu0 0.0
          %365 = vmatprep.subr.mxu0 0.0
          %366 = vmatpush1.msra.mxu0 0.0
          %367 = vmatprep.subr.mxu0 0.0
          %368 = vmatpush1.msra.mxu0 0.0
          %369 = vmatprep.mubr.f32.mxu0 0.0
          %370 = vmatmul.mubr.f32.gmra.mrb[0].mxu0 %v267
          %v371 = vpop.f32.mrb[0].mxu0
          %v372 = vadd.f32 0.0, %v371
          %v373 = vpop.f32.mrb[0].mxu0
          %374 = vmatprep.mubr.f32.mxu0 0.0
          %375 = vmatmul.mubr.f32.gmra.mrb[0].mxu0 %v270
          %v376 = vpop.f32.mrb[0].mxu0
          %v377 = vadd.f32 0.0, %v376
          %v378 = vpop.f32.mrb[0].mxu0
          %379 = vmatprep.mubr.f32.mxu0 0.0
          %380 = vmatmul.mubr.f32.gmra.mrb[0].mxu0 %v273
          %v381 = vpop.f32.mrb[0].mxu0
          %v382 = vadd.f32 0.0, %v381
          %v383 = vpop.f32.mrb[0].mxu0
          %384 = vmatprep.mubr.f32.mxu0 0.0
          %385 = vmatmul.mubr.f32.gmra.mrb[0].mxu0 %v276
          %v386 = vpop.f32.mrb[0].mxu0
          %v387 = vadd.f32 0.0, %v386
          %v388 = vpop.f32.mrb[0].mxu0
          %389 = vmatprep.mubr.f32.mxu0 0.0
          %390 = vmatmul.mubr.f32.gmra.mrb[0].mxu0 %v279
          %v391 = vpop.f32.mrb[0].mxu0
          %v392 = vadd.f32 0.0, %v391
          %v393 = vpop.f32.mrb[0].mxu0
          %394 = vmatprep.mubr.f32.mxu0 0.0
          %395 = vmatmul.mubr.f32.gmra.mrb[0].mxu0 %v282
          %v396 = vpop.f32.mrb[0].mxu0
          %v397 = vadd.f32 0.0, %v396
          %v398 = vpop.f32.mrb[0].mxu0
          %399 = vmatprep.mubr.f32.mxu0 0.0
          %400 = vmatmul.mubr.f32.gmra.mrb[0].mxu0 %v285
          %v401 = vpop.f32.mrb[0].mxu0
          %v402 = vadd.f32 0.0, %v401
          %v403 = vpop.f32.mrb[0].mxu0
          %404 = vmatprep.mubr.f32.mxu0 0.0
          %405 = vmatmul.mubr.f32.gmra.mrb[0].mxu0 %v288
          %v406 = vpop.f32.mrb[0].mxu0
          %v407 = vadd.f32 0.0, %v406
          %v408 = vpop.f32.mrb[0].mxu0
          %409 = vmatprep.mubr.f32.mxu0 0.0
          %410 = vmatmul.mubr.f32.gmra.mrb[0].mxu0 %v291
          %v411 = vpop.f32.mrb[0].mxu0
          %v412 = vadd.f32 0.0, %v411
          %v413 = vpop.f32.mrb[0].mxu0
          %414 = vmatprep.mubr.f32.mxu0 0.0
          %415 = vmatmul.mubr.f32.gmra.mrb[0].mxu0 %v294
          %v416 = vpop.f32.mrb[0].mxu0
          %v417 = vadd.f32 0.0, %v416
          %v418 = vpop.f32.mrb[0].mxu0
          %419 = vmatprep.mubr.f32.mxu0 0.0
          %420 = vmatmul.mubr.f32.gmra.mrb[0].mxu0 %v297
          %v421 = vpop.f32.mrb[0].mxu0
          %v422 = vadd.f32 0.0, %v421
          %v423 = vpop.f32.mrb[0].mxu0
          %424 = vmatprep.mubr.f32.mxu0 0.0
          %425 = vmatmul.mubr.f32.gmra.mrb[0].mxu0 %v300
          %v426 = vpop.f32.mrb[0].mxu0
          %v427 = vadd.f32 0.0, %v426
          %v428 = vpop.f32.mrb[0].mxu0
          %429 = vmatprep.mubr.f32.mxu0 0.0
          %430 = vmatmul.mubr.f32.gmra.mrb[0].mxu0 %v303
          %v431 = vpop.f32.mrb[0].mxu0
          %v432 = vadd.f32 0.0, %v431
          %v433 = vpop.f32.mrb[0].mxu0
          %434 = vdwg.mxu0
          %v435 = vld [vmem:[%s2] sm:$0xff]
          %v436 = vld [vmem:[%s2 + $0x8] sm:$0xff]
          %v437 = vld [vmem:[%s2 + $0x10] sm:$0xff]
          %v438 = vld [vmem:[%s2 + $0x18] sm:$0xff]
          %439 = vmatprep.subr.mxu0 0.0
          %440 = vmatpush1.xpose.msra.mxu0 %v435
          %441 = vmatprep.subr.mxu0 0.0
          %442 = vmatpush1.xpose.msra.mxu0 %v436
          %443 = vmatprep.subr.mxu0 0.0
          %444 = vmatpush1.xpose.msra.mxu0 %v437
          %445 = vmatprep.subr.mxu0 0.0
          %446 = vmatpush1.xpose.msra.mxu0 %v438
          %447 = vmatprep.subr.mxu0 0.0
          %448 = vmatpush1.xpose.msra.mxu0 0.0
          %449 = vmatprep.subr.mxu0 0.0
          %450 = vmatpush1.xpose.msra.mxu0 0.0
          %451 = vmatprep.subr.mxu0 0.0
          %452 = vmatpush1.xpose.msra.mxu0 0.0
          %453 = vmatprep.subr.mxu0 0.0
          %454 = vmatpush1.xpose.msra.mxu0 0.0
          %455 = vmatprep.subr.mxu0 0.0
          %456 = vmatpush1.xpose.msra.mxu0 0.0
          %457 = vmatprep.subr.mxu0 0.0
          %458 = vmatpush1.xpose.msra.mxu0 0.0
          %459 = vmatprep.subr.mxu0 0.0
          %460 = vmatpush1.xpose.msra.mxu0 0.0
          %461 = vmatprep.subr.mxu0 0.0
          %462 = vmatpush1.xpose.msra.mxu0 0.0
          %463 = vmatprep.subr.mxu0 0.0
          %464 = vmatpush1.xpose.msra.mxu0 0.0
          %465 = vmatprep.subr.mxu0 0.0
          %466 = vmatpush1.xpose.msra.mxu0 0.0
          %467 = vmatprep.subr.mxu0 0.0
          %468 = vmatpush1.xpose.msra.mxu0 0.0
          %469 = vmatprep.subr.mxu0 0.0
          %470 = vmatpush1.xpose.msra.mxu0 0.0
          %471 = vmatprep.subr.mxu0 0.0
          %472 = vmatpush1.xpose.msra.mxu0 0.0
          %473 = vmatprep.subr.mxu0 0.0
          %474 = vmatpush1.xpose.msra.mxu0 0.0
          %475 = vmatprep.subr.mxu0 0.0
          %476 = vmatpush1.xpose.msra.mxu0 0.0
          %477 = vmatprep.subr.mxu0 0.0
          %478 = vmatpush1.xpose.msra.mxu0 0.0
          %479 = vmatprep.subr.mxu0 0.0
          %480 = vmatpush1.xpose.msra.mxu0 0.0
          %481 = vmatprep.subr.mxu0 0.0
          %482 = vmatpush1.xpose.msra.mxu0 0.0
          %483 = vmatprep.subr.mxu0 0.0
          %484 = vmatpush1.xpose.msra.mxu0 0.0
          %485 = vmatprep.subr.mxu0 0.0
          %486 = vmatpush1.xpose.msra.mxu0 0.0
          %487 = vmatprep.subr.mxu0 0.0
          %488 = vmatpush1.xpose.msra.mxu0 0.0
          %489 = vmatprep.subr.mxu0 0.0
          %490 = vmatpush1.xpose.msra.mxu0 0.0
          %491 = vmatprep.subr.mxu0 0.0
          %492 = vmatpush1.xpose.msra.mxu0 0.0
          %493 = vmatprep.subr.mxu0 0.0
          %494 = vmatpush1.xpose.msra.mxu0 0.0
          %495 = vmatprep.subr.mxu0 0.0
          %496 = vmatpush1.xpose.msra.mxu0 0.0
          %497 = vmatprep.subr.mxu0 0.0
          %498 = vmatpush1.xpose.msra.mxu0 0.0
          %499 = vmatprep.subr.mxu0 0.0
          %500 = vmatpush1.xpose.msra.mxu0 0.0
          %501 = vmatprep.subr.mxu0 0.0
          %502 = vmatpush1.xpose.msra.mxu0 0.0
          %503 = vmatprep.mubr.f32.mxu0 0.0
          %504 = vmatmul.mubr.f32.gmra.mrb[0].mxu0 %v372
          %v505 = vpop.f32.mrb[0].mxu0
          %v506 = vadd.f32 0.0, %v505
          %v507 = vpop.f32.mrb[0].mxu0
          %508 = vmatprep.mubr.f32.mxu0 0.0
          %509 = vmatmul.mubr.f32.gmra.mrb[0].mxu0 %v377
          %v510 = vpop.f32.mrb[0].mxu0
          %v511 = vadd.f32 0.0, %v510
          %v512 = vpop.f32.mrb[0].mxu0
          %513 = vmatprep.mubr.f32.mxu0 0.0
          %514 = vmatmul.mubr.f32.gmra.mrb[0].mxu0 %v382
          %v515 = vpop.f32.mrb[0].mxu0
          %v516 = vadd.f32 0.0, %v515
          %v517 = vpop.f32.mrb[0].mxu0
          %518 = vmatprep.mubr.f32.mxu0 0.0
          %519 = vmatmul.mubr.f32.gmra.mrb[0].mxu0 %v387
          %v520 = vpop.f32.mrb[0].mxu0
          %v521 = vadd.f32 0.0, %v520
          %v522 = vpop.f32.mrb[0].mxu0
          %523 = vmatprep.mubr.f32.mxu0 0.0
          %524 = vmatmul.mubr.f32.gmra.mrb[0].mxu0 %v392
          %v525 = vpop.f32.mrb[0].mxu0
          %v526 = vadd.f32 0.0, %v525
          %v527 = vpop.f32.mrb[0].mxu0
          %528 = vmatprep.mubr.f32.mxu0 0.0
          %529 = vmatmul.mubr.f32.gmra.mrb[0].mxu0 %v397
          %v530 = vpop.f32.mrb[0].mxu0
          %v531 = vadd.f32 0.0, %v530
          %v532 = vpop.f32.mrb[0].mxu0
          %533 = vmatprep.mubr.f32.mxu0 0.0
          %534 = vmatmul.mubr.f32.gmra.mrb[0].mxu0 %v402
          %v535 = vpop.f32.mrb[0].mxu0
          %v536 = vadd.f32 0.0, %v535
          %v537 = vpop.f32.mrb[0].mxu0
          %538 = vmatprep.mubr.f32.mxu0 0.0
          %539 = vmatmul.mubr.f32.gmra.mrb[0].mxu0 %v407
          %v540 = vpop.f32.mrb[0].mxu0
          %v541 = vadd.f32 0.0, %v540
          %v542 = vpop.f32.mrb[0].mxu0
          %543 = vmatprep.mubr.f32.mxu0 0.0
          %544 = vmatmul.mubr.f32.gmra.mrb[0].mxu0 %v412
          %v545 = vpop.f32.mrb[0].mxu0
          %v546 = vadd.f32 0.0, %v545
          %v547 = vpop.f32.mrb[0].mxu0
          %548 = vmatprep.mubr.f32.mxu0 0.0
          %549 = vmatmul.mubr.f32.gmra.mrb[0].mxu0 %v417
          %v550 = vpop.f32.mrb[0].mxu0
          %v551 = vadd.f32 0.0, %v550
          %v552 = vpop.f32.mrb[0].mxu0
          %553 = vmatprep.mubr.f32.mxu0 0.0
          %554 = vmatmul.mubr.f32.gmra.mrb[0].mxu0 %v422
          %v555 = vpop.f32.mrb[0].mxu0
          %v556 = vadd.f32 0.0, %v555
          %v557 = vpop.f32.mrb[0].mxu0
          %558 = vmatprep.mubr.f32.mxu0 0.0
          %559 = vmatmul.mubr.f32.gmra.mrb[0].mxu0 %v427
          %v560 = vpop.f32.mrb[0].mxu0
          %v561 = vadd.f32 0.0, %v560
          %v562 = vpop.f32.mrb[0].mxu0
          %563 = vmatprep.mubr.f32.mxu0 0.0
          %564 = vmatmul.mubr.f32.gmra.mrb[0].mxu0 %v432
          %v565 = vpop.f32.mrb[0].mxu0
          %v566 = vadd.f32 0.0, %v565
          %v567 = vpop.f32.mrb[0].mxu0
          %568 = vdwg.mxu0
          %v569 = vpack.c.bf16 %v511, %v506
          %v570 = vpack.c.bf16 %v521, %v516
          %v571 = vpack.c.bf16 %v531, %v526
          %v572 = vpack.c.bf16 %v541, %v536
          %v573 = vpack.c.bf16 %v551, %v546
          %v574 = vpack.c.bf16 %v561, %v556
          %v575 = vpack.c.bf16 %v566, %v566
          %v583 = vunpack.c.l.b16 %v569
          %v584 = vunpack.c.h.b16 %v569
          %v585 = vunpack.c.l.b16 %v570
          %v586 = vunpack.c.h.b16 %v570
          %v587 = vunpack.c.l.b16 %v571
          %v588 = vunpack.c.h.b16 %v571
          %v589 = vunpack.c.l.b16 %v572
          %v590 = vunpack.c.h.b16 %v572
          %v591 = vunpack.c.l.b16 %v573
          %v592 = vunpack.c.h.b16 %v573
          %v593 = vunpack.c.l.b16 %v574
          %v594 = vunpack.c.h.b16 %v574
          %v595 = vunpack.c.l.b16 %v575
          %v596 = vpack.c.b16 %v583, %v583
          %v597 = vpack.c.b16 %v584, %v584
          %v598 = vpack.c.b16 %v585, %v585
          %v599 = vpack.c.b16 %v586, %v586
          %v600 = vpack.c.b16 %v587, %v587
          %v601 = vpack.c.b16 %v588, %v588
          %v602 = vpack.c.b16 %v589, %v589
          %v603 = vpack.c.b16 %v590, %v590
          %v604 = vpack.c.b16 %v591, %v591
          %v605 = vpack.c.b16 %v592, %v592
          %v606 = vpack.c.b16 %v593, %v593
          %v607 = vpack.c.b16 %v594, %v594
          %v608 = vpack.c.b16 %v595, %v595
          %vm622 = vcmask 257024
          %623 = vst.msk [vmem:[#allocation2] sm:$0xf] %vm622, %v596
          %624 = vst.msk [vmem:[#allocation2 + $0x4] sm:$0xf] %vm622, %v597
          %625 = vst.msk [vmem:[#allocation2 + $0x8] sm:$0xf] %vm622, %v598
          %626 = vst.msk [vmem:[#allocation2 + $0xc] sm:$0xf] %vm622, %v599
          %627 = vst.msk [vmem:[#allocation2 + $0x10] sm:$0xf] %vm622, %v600
          %628 = vst.msk [vmem:[#allocation2 + $0x14] sm:$0xf] %vm622, %v601
          %629 = vst.msk [vmem:[#allocation2 + $0x18] sm:$0xf] %vm622, %v602
          %630 = vst.msk [vmem:[#allocation2 + $0x1c] sm:$0xf] %vm622, %v603
          %631 = vst.msk [vmem:[#allocation2 + $0x20] sm:$0xf] %vm622, %v604
          %632 = vst.msk [vmem:[#allocation2 + $0x24] sm:$0xf] %vm622, %v605
          %633 = vst.msk [vmem:[#allocation2 + $0x28] sm:$0xf] %vm622, %v606
          %634 = vst.msk [vmem:[#allocation2 + $0x2c] sm:$0xf] %vm622, %v607
          %635 = vst.msk [vmem:[#allocation2 + $0x30] sm:$0xf] %vm622, %v608
          %vm636 = vcmask 7168
          %637 = vst.msk [vmem:[#allocation3] sm:$0xff] %vm636, -inf
          %638 = vst.msk [vmem:[#allocation3 + $0x8] sm:$0xff] %vm636, -inf
          %639 = vst.msk [vmem:[#allocation3 + $0x10] sm:$0xff] %vm636, -inf
          %640 = vst.msk [vmem:[#allocation3 + $0x18] sm:$0xff] %vm636, -inf
          %641 = vst.msk [vmem:[#allocation3 + $0x20] sm:$0xff] %vm636, -inf
          %642 = vst.msk [vmem:[#allocation3 + $0x28] sm:$0xff] %vm636, -inf
          %643 = vst.msk [vmem:[#allocation3 + $0x30] sm:$0xff] %vm636, -inf
          %644 = vst.msk [vmem:[#allocation3 + $0x38] sm:$0xff] %vm636, -inf
          %645 = vst.msk [vmem:[#allocation3 + $0x40] sm:$0xff] %vm636, -inf
          %646 = vst.msk [vmem:[#allocation3 + $0x48] sm:$0xff] %vm636, -inf
          %647 = vst.msk [vmem:[#allocation3 + $0x50] sm:$0xff] %vm636, -inf
          %648 = vst.msk [vmem:[#allocation3 + $0x58] sm:$0xff] %vm636, -inf
          %649 = vst.msk [vmem:[#allocation3 + $0x60] sm:$0xff] %vm636, -inf
          %650 = vst.msk [vmem:[#allocation4] sm:$0xff] %vm636, 0.0
          %651 = vst.msk [vmem:[#allocation4 + $0x8] sm:$0xff] %vm636, 0.0
          %652 = vst.msk [vmem:[#allocation4 + $0x10] sm:$0xff] %vm636, 0.0
          %653 = vst.msk [vmem:[#allocation4 + $0x18] sm:$0xff] %vm636, 0.0
          %654 = vst.msk [vmem:[#allocation4 + $0x20] sm:$0xff] %vm636, 0.0
          %655 = vst.msk [vmem:[#allocation4 + $0x28] sm:$0xff] %vm636, 0.0
          %656 = vst.msk [vmem:[#allocation4 + $0x30] sm:$0xff] %vm636, 0.0
          %657 = vst.msk [vmem:[#allocation4 + $0x38] sm:$0xff] %vm636, 0.0
          %658 = vst.msk [vmem:[#allocation4 + $0x40] sm:$0xff] %vm636, 0.0
          %659 = vst.msk [vmem:[#allocation4 + $0x48] sm:$0xff] %vm636, 0.0
          %660 = vst.msk [vmem:[#allocation4 + $0x50] sm:$0xff] %vm636, 0.0
          %661 = vst.msk [vmem:[#allocation4 + $0x58] sm:$0xff] %vm636, 0.0
          %662 = vst.msk [vmem:[#allocation4 + $0x60] sm:$0xff] %vm636, 0.0
        $region40: #{recommender_forward.1} parent=35 // pred_fallthru
          _
        %v663 = vld [vmem:[#allocation2] sm:$0xf]
        %v664 = vld [vmem:[#allocation2 + $0x4] sm:$0xf]
        %v665 = vld [vmem:[#allocation2 + $0x8] sm:$0xf]
        %v666 = vld [vmem:[#allocation2 + $0xc] sm:$0xf]
        %v667 = vld [vmem:[#allocation2 + $0x10] sm:$0xf]
        %v668 = vld [vmem:[#allocation2 + $0x14] sm:$0xf]
        %v669 = vld [vmem:[#allocation2 + $0x18] sm:$0xf]
        %v670 = vld [vmem:[#allocation2 + $0x1c] sm:$0xf]
        %v671 = vld [vmem:[#allocation2 + $0x20] sm:$0xf]
        %v672 = vld [vmem:[#allocation2 + $0x24] sm:$0xf]
        %v673 = vld [vmem:[#allocation2 + $0x28] sm:$0xf]
        %v674 = vld [vmem:[#allocation2 + $0x2c] sm:$0xf]
        %v675 = vld [vmem:[#allocation2 + $0x30] sm:$0xf]
        %v676 = vld [vmem:[%s237] sm:$0xf]
        %v677 = vld [vmem:[%s237 + $0x4] sm:$0xf]
        %v678 = vld [vmem:[%s237 + $0x8] sm:$0xf]
        %v679 = vld [vmem:[%s237 + $0xc] sm:$0xf]
        %v680 = vld [vmem:[%s237 + $0x10] sm:$0xf]
        %v681 = vld [vmem:[%s237 + $0x14] sm:$0xf]
        %v682 = vld [vmem:[%s237 + $0x18] sm:$0xf]
        %v683 = vld [vmem:[%s237 + $0x1c] sm:$0xf]
        %v684 = vld [vmem:[%s237 + $0x20] sm:$0xf]
        %v685 = vld [vmem:[%s237 + $0x24] sm:$0xf]
        %v686 = vld [vmem:[%s237 + $0x28] sm:$0xf]
        %v687 = vld [vmem:[%s237 + $0x2c] sm:$0xf]
        %v688 = vld [vmem:[%s237 + $0x30] sm:$0xf]
        %v689 = vld [vmem:[%s237 + $0x34] sm:$0xf]
        %v690 = vld [vmem:[%s237 + $0x38] sm:$0xf]
        %v691 = vld [vmem:[%s237 + $0x3c] sm:$0xf]
        %v705 = vunpack.c.l.b16 %v663
        %v706 = vunpack.c.l.b16 %v664
        %v707 = vunpack.c.l.b16 %v665
        %v708 = vunpack.c.l.b16 %v666
        %v709 = vunpack.c.l.b16 %v667
        %v710 = vunpack.c.l.b16 %v668
        %v711 = vunpack.c.l.b16 %v669
        %v712 = vunpack.c.l.b16 %v670
        %v713 = vunpack.c.l.b16 %v671
        %v714 = vunpack.c.l.b16 %v672
        %v715 = vunpack.c.l.b16 %v673
        %v716 = vunpack.c.l.b16 %v674
        %v717 = vunpack.c.l.b16 %v675
        %v718 = vpack.c.b16 %v706, %v705
        %v719 = vpack.c.b16 %v708, %v707
        %v720 = vpack.c.b16 %v710, %v709
        %v721 = vpack.c.b16 %v712, %v711
        %v722 = vpack.c.b16 %v714, %v713
        %v723 = vpack.c.b16 %v716, %v715
        %v724 = vpack.c.b16 %v717, %v717
        %v741 = vunpack.c.l.b16 %v676
        %v742 = vunpack.c.l.b16 %v677
        %v743 = vunpack.c.l.b16 %v678
        %v744 = vunpack.c.l.b16 %v679
        %v745 = vunpack.c.l.b16 %v680
        %v746 = vunpack.c.l.b16 %v681
        %v747 = vunpack.c.l.b16 %v682
        %v748 = vunpack.c.l.b16 %v683
        %v749 = vunpack.c.l.b16 %v684
        %v750 = vunpack.c.l.b16 %v685
        %v751 = vunpack.c.l.b16 %v686
        %v752 = vunpack.c.l.b16 %v687
        %v753 = vunpack.c.l.b16 %v688
        %v754 = vunpack.c.l.b16 %v689
        %v755 = vunpack.c.l.b16 %v690
        %v756 = vunpack.c.l.b16 %v691
        %v757 = vpack.c.b16 %v742, %v741
        %v758 = vpack.c.b16 %v744, %v743
        %v759 = vpack.c.b16 %v746, %v745
        %v760 = vpack.c.b16 %v748, %v747
        %v761 = vpack.c.b16 %v750, %v749
        %v762 = vpack.c.b16 %v752, %v751
        %v763 = vpack.c.b16 %v754, %v753
        %v764 = vpack.c.b16 %v756, %v755
        %vm765 = vcmask 261120
        %v767 = vsel %vm765, %v718, 0
        %v770 = vsel %vm765, %v719, 0
        %v773 = vsel %vm765, %v720, 0
        %v776 = vsel %vm765, %v721, 0
        %v779 = vsel %vm765, %v722, 0
        %v782 = vsel %vm765, %v723, 0
        %v785 = vsel %vm765, %v724, 0
        %v788 = vsel %vm765, %v757, 0
        %v791 = vsel %vm765, %v758, 0
        %v794 = vsel %vm765, %v759, 0
        %v797 = vsel %vm765, %v760, 0
        %v800 = vsel %vm765, %v761, 0
        %v803 = vsel %vm765, %v762, 0
        %v806 = vsel %vm765, %v763, 0
        %v809 = vsel %vm765, %v764, 0
        %811 = vmatprep.subr.bf16.mxu0 0
        %812 = vmatpush1.bf16.xpose.msra.mxu0 %v788
        %813 = vmatprep.subr.bf16.mxu0 0
        %814 = vmatpush1.bf16.xpose.msra.mxu0 %v791
        %815 = vmatprep.subr.bf16.mxu0 0
        %816 = vmatpush1.bf16.xpose.msra.mxu0 %v794
        %817 = vmatprep.subr.bf16.mxu0 0
        %818 = vmatpush1.bf16.xpose.msra.mxu0 %v797
        %819 = vmatprep.subr.bf16.mxu0 0
        %820 = vmatpush1.bf16.xpose.msra.mxu0 %v800
        %821 = vmatprep.subr.bf16.mxu0 0
        %822 = vmatpush1.bf16.xpose.msra.mxu0 %v803
        %823 = vmatprep.subr.bf16.mxu0 0
        %824 = vmatpush1.bf16.xpose.msra.mxu0 %v806
        %825 = vmatprep.subr.bf16.mxu0 0
        %826 = vmatpush1.bf16.xpose.msra.mxu0 %v809
        %827 = vmatprep.subr.bf16.mxu0 0
        %828 = vmatpush1.bf16.xpose.msra.mxu0 0
        %829 = vmatprep.subr.bf16.mxu0 0
        %830 = vmatpush1.bf16.xpose.msra.mxu0 0
        %831 = vmatprep.subr.bf16.mxu0 0
        %832 = vmatpush1.bf16.xpose.msra.mxu0 0
        %833 = vmatprep.subr.bf16.mxu0 0
        %834 = vmatpush1.bf16.xpose.msra.mxu0 0
        %835 = vmatprep.subr.bf16.mxu0 0
        %836 = vmatpush1.bf16.xpose.msra.mxu0 0
        %837 = vmatprep.subr.bf16.mxu0 0
        %838 = vmatpush1.bf16.xpose.msra.mxu0 0
        %839 = vmatprep.subr.bf16.mxu0 0
        %840 = vmatpush1.bf16.xpose.msra.mxu0 0
        %841 = vmatprep.subr.bf16.mxu0 0
        %842 = vmatpush1.bf16.xpose.msra.mxu0 0
        %843 = vmatprep.mubr.bf16.mxu0 0
        %844 = vmatmul.mubr.bf16.gmra.mrb[0].mxu0 %v767
        %v845 = vpop.f32.mrb[0].mxu0
        %v846 = vadd.f32 0.0, %v845
        %v847 = vpop.f32.mrb[0].mxu0
        %v848 = vpop.f32.mrb[0].mxu0
        %v849 = vadd.f32 0.0, %v848
        %v850 = vpop.f32.mrb[0].mxu0
        %851 = vmatprep.mubr.bf16.mxu0 0
        %852 = vmatmul.mubr.bf16.gmra.mrb[0].mxu0 %v770
        %v853 = vpop.f32.mrb[0].mxu0
        %v854 = vadd.f32 0.0, %v853
        %v855 = vpop.f32.mrb[0].mxu0
        %v856 = vpop.f32.mrb[0].mxu0
        %v857 = vadd.f32 0.0, %v856
        %v858 = vpop.f32.mrb[0].mxu0
        %859 = vmatprep.mubr.bf16.mxu0 0
        %860 = vmatmul.mubr.bf16.gmra.mrb[0].mxu0 %v773
        %v861 = vpop.f32.mrb[0].mxu0
        %v862 = vadd.f32 0.0, %v861
        %v863 = vpop.f32.mrb[0].mxu0
        %v864 = vpop.f32.mrb[0].mxu0
        %v865 = vadd.f32 0.0, %v864
        %v866 = vpop.f32.mrb[0].mxu0
        %867 = vmatprep.mubr.bf16.mxu0 0
        %868 = vmatmul.mubr.bf16.gmra.mrb[0].mxu0 %v776
        %v869 = vpop.f32.mrb[0].mxu0
        %v870 = vadd.f32 0.0, %v869
        %v871 = vpop.f32.mrb[0].mxu0
        %v872 = vpop.f32.mrb[0].mxu0
        %v873 = vadd.f32 0.0, %v872
        %v874 = vpop.f32.mrb[0].mxu0
        %875 = vmatprep.mubr.bf16.mxu0 0
        %876 = vmatmul.mubr.bf16.gmra.mrb[0].mxu0 %v779
        %v877 = vpop.f32.mrb[0].mxu0
        %v878 = vadd.f32 0.0, %v877
        %v879 = vpop.f32.mrb[0].mxu0
        %v880 = vpop.f32.mrb[0].mxu0
        %v881 = vadd.f32 0.0, %v880
        %v882 = vpop.f32.mrb[0].mxu0
        %883 = vmatprep.mubr.bf16.mxu0 0
        %884 = vmatmul.mubr.bf16.gmra.mrb[0].mxu0 %v782
        %v885 = vpop.f32.mrb[0].mxu0
        %v886 = vadd.f32 0.0, %v885
        %v887 = vpop.f32.mrb[0].mxu0
        %v888 = vpop.f32.mrb[0].mxu0
        %v889 = vadd.f32 0.0, %v888
        %v890 = vpop.f32.mrb[0].mxu0
        %891 = vmatprep.mubr.bf16.mxu0 0
        %892 = vmatmul.mubr.bf16.gmra.mrb[0].mxu0 %v785
        %v893 = vpop.f32.mrb[0].mxu0
        %v894 = vadd.f32 0.0, %v893
        %v895 = vpop.f32.mrb[0].mxu0
        %v896 = vpop.f32.mrb[0].mxu0
        %v897 = vpop.f32.mrb[0].mxu0
        %898 = vdwg.mxu0
        %s899 = smul.u32 %s22, 128
        %v900 = vlaneseq
        %v901 = vand.u32 %v900, 127
        %v902 = vstv %s899
        %v903 = vadd.s32 %v902, %v901
        %vm904 = vcmp.lt.s32.totalorder %v903, 200
        %v905 = vsel %vm904, %v846, -inf
        %v906 = vsel %vm904, %v849, -inf
        %v907 = vsel %vm904, %v854, -inf
        %v908 = vsel %vm904, %v857, -inf
        %v909 = vsel %vm904, %v862, -inf
        %v910 = vsel %vm904, %v865, -inf
        %v911 = vsel %vm904, %v870, -inf
        %v912 = vsel %vm904, %v873, -inf
        %v913 = vsel %vm904, %v878, -inf
        %v914 = vsel %vm904, %v881, -inf
        %v915 = vsel %vm904, %v886, -inf
        %v916 = vsel %vm904, %v889, -inf
        %v917 = vsel %vm904, %v894, -inf
        // Predicated region
        $region41: #{recommender_forward.1} parent=35 // pred_check
          %p918 = pneg %p242
        $region42: #{recommender_forward.1} parent=35 // pred_check_branch
          %920 = sbr.rel (%p918) target = $region44
        $region43: #{recommender_forward.1} parent=35 // pred_region
          %v921 = vld [vmem:[#allocation3] sm:$0xff]
          %v922 = vld [vmem:[#allocation3 + $0x8] sm:$0xff]
          %v923 = vld [vmem:[#allocation3 + $0x10] sm:$0xff]
          %v924 = vld [vmem:[#allocation3 + $0x18] sm:$0xff]
          %v925 = vld [vmem:[#allocation3 + $0x20] sm:$0xff]
          %v926 = vld [vmem:[#allocation3 + $0x28] sm:$0xff]
          %v927 = vld [vmem:[#allocation3 + $0x30] sm:$0xff]
          %v928 = vld [vmem:[#allocation3 + $0x38] sm:$0xff]
          %v929 = vld [vmem:[#allocation3 + $0x40] sm:$0xff]
          %v930 = vld [vmem:[#allocation3 + $0x48] sm:$0xff]
          %v931 = vld [vmem:[#allocation3 + $0x50] sm:$0xff]
          %v932 = vld [vmem:[#allocation3 + $0x58] sm:$0xff]
          %v933 = vld [vmem:[#allocation3 + $0x60] sm:$0xff]
          %934 = vmax.xlane.f32.xlu0 %v905
          %v935 = vpop.xlane.xlu0 %934
          %936 = vmax.xlane.f32.xlu0 %v906
          %v937 = vpop.xlane.xlu0 %936
          %938 = vmax.xlane.f32.xlu0 %v907
          %v939 = vpop.xlane.xlu0 %938
          %940 = vmax.xlane.f32.xlu0 %v908
          %v941 = vpop.xlane.xlu0 %940
          %942 = vmax.xlane.f32.xlu0 %v909
          %v943 = vpop.xlane.xlu0 %942
          %944 = vmax.xlane.f32.xlu0 %v910
          %v945 = vpop.xlane.xlu0 %944
          %946 = vmax.xlane.f32.xlu0 %v911
          %v947 = vpop.xlane.xlu0 %946
          %948 = vmax.xlane.f32.xlu0 %v912
          %v949 = vpop.xlane.xlu0 %948
          %950 = vmax.xlane.f32.xlu0 %v913
          %v951 = vpop.xlane.xlu0 %950
          %952 = vmax.xlane.f32.xlu0 %v914
          %v953 = vpop.xlane.xlu0 %952
          %954 = vmax.xlane.f32.xlu0 %v915
          %v955 = vpop.xlane.xlu0 %954
          %956 = vmax.xlane.f32.xlu0 %v916
          %v957 = vpop.xlane.xlu0 %956
          %958 = vmax.xlane.f32.xlu0 %v917
          %v959 = vpop.xlane.xlu0 %958
          %v960 = vmax.f32 %v921, %v935
          %v961 = vmax.f32 %v922, %v937
          %v962 = vmax.f32 %v923, %v939
          %v963 = vmax.f32 %v924, %v941
          %v964 = vmax.f32 %v925, %v943
          %v965 = vmax.f32 %v926, %v945
          %v966 = vmax.f32 %v927, %v947
          %v967 = vmax.f32 %v928, %v949
          %v968 = vmax.f32 %v929, %v951
          %v969 = vmax.f32 %v930, %v953
          %v970 = vmax.f32 %v931, %v955
          %v971 = vmax.f32 %v932, %v957
          %v972 = vmax.f32 %v933, %v959
          %v973 = vld [vmem:[#allocation4] sm:$0xff]
          %v974 = vld [vmem:[#allocation4 + $0x8] sm:$0xff]
          %v975 = vld [vmem:[#allocation4 + $0x10] sm:$0xff]
          %v976 = vld [vmem:[#allocation4 + $0x18] sm:$0xff]
          %v977 = vld [vmem:[#allocation4 + $0x20] sm:$0xff]
          %v978 = vld [vmem:[#allocation4 + $0x28] sm:$0xff]
          %v979 = vld [vmem:[#allocation4 + $0x30] sm:$0xff]
          %v980 = vld [vmem:[#allocation4 + $0x38] sm:$0xff]
          %v981 = vld [vmem:[#allocation4 + $0x40] sm:$0xff]
          %v982 = vld [vmem:[#allocation4 + $0x48] sm:$0xff]
          %v983 = vld [vmem:[#allocation4 + $0x50] sm:$0xff]
          %v984 = vld [vmem:[#allocation4 + $0x58] sm:$0xff]
          %v985 = vld [vmem:[#allocation4 + $0x60] sm:$0xff]
          %v986 = vsub.f32 %v921, %v960
          %v987 = vsub.f32 %v922, %v961
          %v988 = vsub.f32 %v923, %v962
          %v989 = vsub.f32 %v924, %v963
          %v990 = vsub.f32 %v925, %v964
          %v991 = vsub.f32 %v926, %v965
          %v992 = vsub.f32 %v927, %v966
          %v993 = vsub.f32 %v928, %v967
          %v994 = vsub.f32 %v929, %v968
          %v995 = vsub.f32 %v930, %v969
          %v996 = vsub.f32 %v931, %v970
          %v997 = vsub.f32 %v932, %v971
          %v998 = vsub.f32 %v933, %v972
          %v999 = vmul.f32 %v986, 1.442695
          %v1000 = vpow.pop %v999
          %v1001 = vmul.f32 %v987, 1.442695
          %v1002 = vpow.pop %v1001
          %v1003 = vmul.f32 %v988, 1.442695
          %v1004 = vpow.pop %v1003
          %v1005 = vmul.f32 %v989, 1.442695
          %v1006 = vpow.pop %v1005
          %v1007 = vmul.f32 %v990, 1.442695
          %v1008 = vpow.pop %v1007
          %v1009 = vmul.f32 %v991, 1.442695
          %v1010 = vpow.pop %v1009
          %v1011 = vmul.f32 %v992, 1.442695
          %v1012 = vpow.pop %v1011
          %v1013 = vmul.f32 %v993, 1.442695
          %v1014 = vpow.pop %v1013
          %v1015 = vmul.f32 %v994, 1.442695
          %v1016 = vpow.pop %v1015
          %v1017 = vmul.f32 %v995, 1.442695
          %v1018 = vpow.pop %v1017
          %v1019 = vmul.f32 %v996, 1.442695
          %v1020 = vpow.pop %v1019
          %v1021 = vmul.f32 %v997, 1.442695
          %v1022 = vpow.pop %v1021
          %v1023 = vmul.f32 %v998, 1.442695
          %v1024 = vpow.pop %v1023
          %v1025 = vmul.f32 %v973, %v1000
          %v1026 = vmul.f32 %v974, %v1002
          %v1027 = vmul.f32 %v975, %v1004
          %v1028 = vmul.f32 %v976, %v1006
          %v1029 = vmul.f32 %v977, %v1008
          %v1030 = vmul.f32 %v978, %v1010
          %v1031 = vmul.f32 %v979, %v1012
          %v1032 = vmul.f32 %v980, %v1014
          %v1033 = vmul.f32 %v981, %v1016
          %v1034 = vmul.f32 %v982, %v1018
          %v1035 = vmul.f32 %v983, %v1020
          %v1036 = vmul.f32 %v984, %v1022
          %v1037 = vmul.f32 %v985, %v1024
          %1039 = vset.pattern.permute.xlu0 0
          %1040 = vperm.xlu0 %1039, %v960
          %v1041 = vpop.permute.xlu0 %1040
          %1044 = vset.pattern.permute.xlu0 0
          %1045 = vperm.xlu0 %1044, %v961
          %v1046 = vpop.permute.xlu0 %1045
          %1049 = vset.pattern.permute.xlu0 0
          %1050 = vperm.xlu0 %1049, %v962
          %v1051 = vpop.permute.xlu0 %1050
          %1054 = vset.pattern.permute.xlu0 0
          %1055 = vperm.xlu0 %1054, %v963
          %v1056 = vpop.permute.xlu0 %1055
          %1059 = vset.pattern.permute.xlu0 0
          %1060 = vperm.xlu0 %1059, %v964
          %v1061 = vpop.permute.xlu0 %1060
          %1064 = vset.pattern.permute.xlu0 0
          %1065 = vperm.xlu0 %1064, %v965
          %v1066 = vpop.permute.xlu0 %1065
          %1069 = vset.pattern.permute.xlu0 0
          %1070 = vperm.xlu0 %1069, %v966
          %v1071 = vpop.permute.xlu0 %1070
          %1074 = vset.pattern.permute.xlu0 0
          %1075 = vperm.xlu0 %1074, %v967
          %v1076 = vpop.permute.xlu0 %1075
          %1079 = vset.pattern.permute.xlu0 0
          %1080 = vperm.xlu0 %1079, %v968
          %v1081 = vpop.permute.xlu0 %1080
          %1084 = vset.pattern.permute.xlu0 0
          %1085 = vperm.xlu0 %1084, %v969
          %v1086 = vpop.permute.xlu0 %1085
          %1089 = vset.pattern.permute.xlu0 0
          %1090 = vperm.xlu0 %1089, %v970
          %v1091 = vpop.permute.xlu0 %1090
          %1094 = vset.pattern.permute.xlu0 0
          %1095 = vperm.xlu0 %1094, %v971
          %v1096 = vpop.permute.xlu0 %1095
          %1099 = vset.pattern.permute.xlu0 0
          %1100 = vperm.xlu0 %1099, %v972
          %v1101 = vpop.permute.xlu0 %1100
          %v1103 = vsub.f32 %v905, %v1041
          %v1104 = vsub.f32 %v906, %v1046
          %v1105 = vsub.f32 %v907, %v1051
          %v1106 = vsub.f32 %v908, %v1056
          %v1107 = vsub.f32 %v909, %v1061
          %v1108 = vsub.f32 %v910, %v1066
          %v1109 = vsub.f32 %v911, %v1071
          %v1110 = vsub.f32 %v912, %v1076
          %v1111 = vsub.f32 %v913, %v1081
          %v1112 = vsub.f32 %v914, %v1086
          %v1113 = vsub.f32 %v915, %v1091
          %v1114 = vsub.f32 %v916, %v1096
          %v1115 = vsub.f32 %v917, %v1101
          %v1116 = vmul.f32 %v1103, 1.442695
          %v1117 = vpow.pop %v1116
          %v1118 = vmul.f32 %v1104, 1.442695
          %v1119 = vpow.pop %v1118
          %v1120 = vmul.f32 %v1105, 1.442695
          %v1121 = vpow.pop %v1120
          %v1122 = vmul.f32 %v1106, 1.442695
          %v1123 = vpow.pop %v1122
          %v1124 = vmul.f32 %v1107, 1.442695
          %v1125 = vpow.pop %v1124
          %v1126 = vmul.f32 %v1108, 1.442695
          %v1127 = vpow.pop %v1126
          %v1128 = vmul.f32 %v1109, 1.442695
          %v1129 = vpow.pop %v1128
          %v1130 = vmul.f32 %v1110, 1.442695
          %v1131 = vpow.pop %v1130
          %v1132 = vmul.f32 %v1111, 1.442695
          %v1133 = vpow.pop %v1132
          %v1134 = vmul.f32 %v1112, 1.442695
          %v1135 = vpow.pop %v1134
          %v1136 = vmul.f32 %v1113, 1.442695
          %v1137 = vpow.pop %v1136
          %v1138 = vmul.f32 %v1114, 1.442695
          %v1139 = vpow.pop %v1138
          %v1140 = vmul.f32 %v1115, 1.442695
          %v1141 = vpow.pop %v1140
          %1142 = vadd.xlane.f32.xlu0 %v1117
          %v1143 = vpop.xlane.xlu0 %1142
          %1144 = vadd.xlane.f32.xlu0 %v1119
          %v1145 = vpop.xlane.xlu0 %1144
          %1146 = vadd.xlane.f32.xlu0 %v1121
          %v1147 = vpop.xlane.xlu0 %1146
          %1148 = vadd.xlane.f32.xlu0 %v1123
          %v1149 = vpop.xlane.xlu0 %1148
          %1150 = vadd.xlane.f32.xlu0 %v1125
          %v1151 = vpop.xlane.xlu0 %1150
          %1152 = vadd.xlane.f32.xlu0 %v1127
          %v1153 = vpop.xlane.xlu0 %1152
          %1154 = vadd.xlane.f32.xlu0 %v1129
          %v1155 = vpop.xlane.xlu0 %1154
          %1156 = vadd.xlane.f32.xlu0 %v1131
          %v1157 = vpop.xlane.xlu0 %1156
          %1158 = vadd.xlane.f32.xlu0 %v1133
          %v1159 = vpop.xlane.xlu0 %1158
          %1160 = vadd.xlane.f32.xlu0 %v1135
          %v1161 = vpop.xlane.xlu0 %1160
          %1162 = vadd.xlane.f32.xlu0 %v1137
          %v1163 = vpop.xlane.xlu0 %1162
          %1164 = vadd.xlane.f32.xlu0 %v1139
          %v1165 = vpop.xlane.xlu0 %1164
          %1166 = vadd.xlane.f32.xlu0 %v1141
          %v1167 = vpop.xlane.xlu0 %1166
          %v1168 = vadd.f32 %v1025, %v1143
          %v1169 = vadd.f32 %v1026, %v1145
          %v1170 = vadd.f32 %v1027, %v1147
          %v1171 = vadd.f32 %v1028, %v1149
          %v1172 = vadd.f32 %v1029, %v1151
          %v1173 = vadd.f32 %v1030, %v1153
          %v1174 = vadd.f32 %v1031, %v1155
          %v1175 = vadd.f32 %v1032, %v1157
          %v1176 = vadd.f32 %v1033, %v1159
          %v1177 = vadd.f32 %v1034, %v1161
          %v1178 = vadd.f32 %v1035, %v1163
          %v1179 = vadd.f32 %v1036, %v1165
          %v1180 = vadd.f32 %v1037, %v1167
          %vm1181 = vcmask 7168
          %1182 = vst.msk [vmem:[#allocation4] sm:$0xff] %vm1181, %v1168
          %1183 = vst.msk [vmem:[#allocation4 + $0x8] sm:$0xff] %vm1181, %v1169
          %1184 = vst.msk [vmem:[#allocation4 + $0x10] sm:$0xff] %vm1181, %v1170
          %1185 = vst.msk [vmem:[#allocation4 + $0x18] sm:$0xff] %vm1181, %v1171
          %1186 = vst.msk [vmem:[#allocation4 + $0x20] sm:$0xff] %vm1181, %v1172
          %1187 = vst.msk [vmem:[#allocation4 + $0x28] sm:$0xff] %vm1181, %v1173
          %1188 = vst.msk [vmem:[#allocation4 + $0x30] sm:$0xff] %vm1181, %v1174
          %1189 = vst.msk [vmem:[#allocation4 + $0x38] sm:$0xff] %vm1181, %v1175
          %1190 = vst.msk [vmem:[#allocation4 + $0x40] sm:$0xff] %vm1181, %v1176
          %1191 = vst.msk [vmem:[#allocation4 + $0x48] sm:$0xff] %vm1181, %v1177
          %1192 = vst.msk [vmem:[#allocation4 + $0x50] sm:$0xff] %vm1181, %v1178
          %1193 = vst.msk [vmem:[#allocation4 + $0x58] sm:$0xff] %vm1181, %v1179
          %1194 = vst.msk [vmem:[#allocation4 + $0x60] sm:$0xff] %vm1181, %v1180
          %1195 = vst.msk [vmem:[#allocation3] sm:$0xff] %vm1181, %v960
          %1196 = vst.msk [vmem:[#allocation3 + $0x8] sm:$0xff] %vm1181, %v961
          %1197 = vst.msk [vmem:[#allocation3 + $0x10] sm:$0xff] %vm1181, %v962
          %1198 = vst.msk [vmem:[#allocation3 + $0x18] sm:$0xff] %vm1181, %v963
          %1199 = vst.msk [vmem:[#allocation3 + $0x20] sm:$0xff] %vm1181, %v964
          %1200 = vst.msk [vmem:[#allocation3 + $0x28] sm:$0xff] %vm1181, %v965
          %1201 = vst.msk [vmem:[#allocation3 + $0x30] sm:$0xff] %vm1181, %v966
          %1202 = vst.msk [vmem:[#allocation3 + $0x38] sm:$0xff] %vm1181, %v967
          %1203 = vst.msk [vmem:[#allocation3 + $0x40] sm:$0xff] %vm1181, %v968
          %1204 = vst.msk [vmem:[#allocation3 + $0x48] sm:$0xff] %vm1181, %v969
          %1205 = vst.msk [vmem:[#allocation3 + $0x50] sm:$0xff] %vm1181, %v970
          %1206 = vst.msk [vmem:[#allocation3 + $0x58] sm:$0xff] %vm1181, %v971
          %1207 = vst.msk [vmem:[#allocation3 + $0x60] sm:$0xff] %vm1181, %v972
        $region44: #{recommender_forward.1} parent=35 // pred_fallthru
          _
        %p1208 = scmp.eq.s32.totalorder %s21, 1
        // Predicated region
        $region45: #{recommender_forward.1} parent=35 // pred_check
          %p1209 = pneg %p1208
        $region46: #{recommender_forward.1} parent=35 // pred_check_branch
          %1211 = sbr.rel (%p1209) target = $region48
        $region47: #{recommender_forward.1} parent=35 // pred_region
          %v1212 = vld [vmem:[#allocation3] sm:$0xff]
          %v1213 = vld [vmem:[#allocation3 + $0x8] sm:$0xff]
          %v1214 = vld [vmem:[#allocation3 + $0x10] sm:$0xff]
          %v1215 = vld [vmem:[#allocation3 + $0x18] sm:$0xff]
          %v1216 = vld [vmem:[#allocation3 + $0x20] sm:$0xff]
          %v1217 = vld [vmem:[#allocation3 + $0x28] sm:$0xff]
          %v1218 = vld [vmem:[#allocation3 + $0x30] sm:$0xff]
          %v1219 = vld [vmem:[#allocation3 + $0x38] sm:$0xff]
          %v1220 = vld [vmem:[#allocation3 + $0x40] sm:$0xff]
          %v1221 = vld [vmem:[#allocation3 + $0x48] sm:$0xff]
          %v1222 = vld [vmem:[#allocation3 + $0x50] sm:$0xff]
          %v1223 = vld [vmem:[#allocation3 + $0x58] sm:$0xff]
          %v1224 = vld [vmem:[#allocation3 + $0x60] sm:$0xff]
          %1226 = vset.pattern.permute.xlu0 0
          %1227 = vperm.xlu0 %1226, %v1212
          %v1228 = vpop.permute.xlu0 %1227
          %1231 = vset.pattern.permute.xlu0 0
          %1232 = vperm.xlu0 %1231, %v1213
          %v1233 = vpop.permute.xlu0 %1232
          %1236 = vset.pattern.permute.xlu0 0
          %1237 = vperm.xlu0 %1236, %v1214
          %v1238 = vpop.permute.xlu0 %1237
          %1241 = vset.pattern.permute.xlu0 0
          %1242 = vperm.xlu0 %1241, %v1215
          %v1243 = vpop.permute.xlu0 %1242
          %1246 = vset.pattern.permute.xlu0 0
          %1247 = vperm.xlu0 %1246, %v1216
          %v1248 = vpop.permute.xlu0 %1247
          %1251 = vset.pattern.permute.xlu0 0
          %1252 = vperm.xlu0 %1251, %v1217
          %v1253 = vpop.permute.xlu0 %1252
          %1256 = vset.pattern.permute.xlu0 0
          %1257 = vperm.xlu0 %1256, %v1218
          %v1258 = vpop.permute.xlu0 %1257
          %1261 = vset.pattern.permute.xlu0 0
          %1262 = vperm.xlu0 %1261, %v1219
          %v1263 = vpop.permute.xlu0 %1262
          %1266 = vset.pattern.permute.xlu0 0
          %1267 = vperm.xlu0 %1266, %v1220
          %v1268 = vpop.permute.xlu0 %1267
          %1271 = vset.pattern.permute.xlu0 0
          %1272 = vperm.xlu0 %1271, %v1221
          %v1273 = vpop.permute.xlu0 %1272
          %1276 = vset.pattern.permute.xlu0 0
          %1277 = vperm.xlu0 %1276, %v1222
          %v1278 = vpop.permute.xlu0 %1277
          %1281 = vset.pattern.permute.xlu0 0
          %1282 = vperm.xlu0 %1281, %v1223
          %v1283 = vpop.permute.xlu0 %1282
          %1286 = vset.pattern.permute.xlu0 0
          %1287 = vperm.xlu0 %1286, %v1224
          %v1288 = vpop.permute.xlu0 %1287
          %v1290 = vsub.f32 %v905, %v1228
          %v1291 = vsub.f32 %v906, %v1233
          %v1292 = vsub.f32 %v907, %v1238
          %v1293 = vsub.f32 %v908, %v1243
          %v1294 = vsub.f32 %v909, %v1248
          %v1295 = vsub.f32 %v910, %v1253
          %v1296 = vsub.f32 %v911, %v1258
          %v1297 = vsub.f32 %v912, %v1263
          %v1298 = vsub.f32 %v913, %v1268
          %v1299 = vsub.f32 %v914, %v1273
          %v1300 = vsub.f32 %v915, %v1278
          %v1301 = vsub.f32 %v916, %v1283
          %v1302 = vsub.f32 %v917, %v1288
          %v1303 = vmul.f32 %v1290, 1.442695
          %v1304 = vpow.pop %v1303
          %v1305 = vmul.f32 %v1291, 1.442695
          %v1306 = vpow.pop %v1305
          %v1307 = vmul.f32 %v1292, 1.442695
          %v1308 = vpow.pop %v1307
          %v1309 = vmul.f32 %v1293, 1.442695
          %v1310 = vpow.pop %v1309
          %v1311 = vmul.f32 %v1294, 1.442695
          %v1312 = vpow.pop %v1311
          %v1313 = vmul.f32 %v1295, 1.442695
          %v1314 = vpow.pop %v1313
          %v1315 = vmul.f32 %v1296, 1.442695
          %v1316 = vpow.pop %v1315
          %v1317 = vmul.f32 %v1297, 1.442695
          %v1318 = vpow.pop %v1317
          %v1319 = vmul.f32 %v1298, 1.442695
          %v1320 = vpow.pop %v1319
          %v1321 = vmul.f32 %v1299, 1.442695
          %v1322 = vpow.pop %v1321
          %v1323 = vmul.f32 %v1300, 1.442695
          %v1324 = vpow.pop %v1323
          %v1325 = vmul.f32 %v1301, 1.442695
          %v1326 = vpow.pop %v1325
          %v1327 = vmul.f32 %v1302, 1.442695
          %v1328 = vpow.pop %v1327
          %v1329 = vld [vmem:[#allocation4] sm:$0xff]
          %v1330 = vld [vmem:[#allocation4 + $0x8] sm:$0xff]
          %v1331 = vld [vmem:[#allocation4 + $0x10] sm:$0xff]
          %v1332 = vld [vmem:[#allocation4 + $0x18] sm:$0xff]
          %v1333 = vld [vmem:[#allocation4 + $0x20] sm:$0xff]
          %v1334 = vld [vmem:[#allocation4 + $0x28] sm:$0xff]
          %v1335 = vld [vmem:[#allocation4 + $0x30] sm:$0xff]
          %v1336 = vld [vmem:[#allocation4 + $0x38] sm:$0xff]
          %v1337 = vld [vmem:[#allocation4 + $0x40] sm:$0xff]
          %v1338 = vld [vmem:[#allocation4 + $0x48] sm:$0xff]
          %v1339 = vld [vmem:[#allocation4 + $0x50] sm:$0xff]
          %v1340 = vld [vmem:[#allocation4 + $0x58] sm:$0xff]
          %v1341 = vld [vmem:[#allocation4 + $0x60] sm:$0xff]
          %v1342 = vrcp.pop %v1329
          %v1343 = vrcp.pop %v1330
          %v1344 = vrcp.pop %v1331
          %v1345 = vrcp.pop %v1332
          %v1346 = vrcp.pop %v1333
          %v1347 = vrcp.pop %v1334
          %v1348 = vrcp.pop %v1335
          %v1349 = vrcp.pop %v1336
          %v1350 = vrcp.pop %v1337
          %v1351 = vrcp.pop %v1338
          %v1352 = vrcp.pop %v1339
          %v1353 = vrcp.pop %v1340
          %v1354 = vrcp.pop %v1341
          %1356 = vset.pattern.permute.xlu0 0
          %1357 = vperm.xlu0 %1356, %v1342
          %v1358 = vpop.permute.xlu0 %1357
          %1361 = vset.pattern.permute.xlu0 0
          %1362 = vperm.xlu0 %1361, %v1343
          %v1363 = vpop.permute.xlu0 %1362
          %1366 = vset.pattern.permute.xlu0 0
          %1367 = vperm.xlu0 %1366, %v1344
          %v1368 = vpop.permute.xlu0 %1367
          %1371 = vset.pattern.permute.xlu0 0
          %1372 = vperm.xlu0 %1371, %v1345
          %v1373 = vpop.permute.xlu0 %1372
          %1376 = vset.pattern.permute.xlu0 0
          %1377 = vperm.xlu0 %1376, %v1346
          %v1378 = vpop.permute.xlu0 %1377
          %1381 = vset.pattern.permute.xlu0 0
          %1382 = vperm.xlu0 %1381, %v1347
          %v1383 = vpop.permute.xlu0 %1382
          %1386 = vset.pattern.permute.xlu0 0
          %1387 = vperm.xlu0 %1386, %v1348
          %v1388 = vpop.permute.xlu0 %1387
          %1391 = vset.pattern.permute.xlu0 0
          %1392 = vperm.xlu0 %1391, %v1349
          %v1393 = vpop.permute.xlu0 %1392
          %1396 = vset.pattern.permute.xlu0 0
          %1397 = vperm.xlu0 %1396, %v1350
          %v1398 = vpop.permute.xlu0 %1397
          %1401 = vset.pattern.permute.xlu0 0
          %1402 = vperm.xlu0 %1401, %v1351
          %v1403 = vpop.permute.xlu0 %1402
          %1406 = vset.pattern.permute.xlu0 0
          %1407 = vperm.xlu0 %1406, %v1352
          %v1408 = vpop.permute.xlu0 %1407
          %1411 = vset.pattern.permute.xlu0 0
          %1412 = vperm.xlu0 %1411, %v1353
          %v1413 = vpop.permute.xlu0 %1412
          %1416 = vset.pattern.permute.xlu0 0
          %1417 = vperm.xlu0 %1416, %v1354
          %v1418 = vpop.permute.xlu0 %1417
          %v1420 = vmul.f32 %v1304, %v1358
          %v1421 = vmul.f32 %v1306, %v1363
          %v1422 = vmul.f32 %v1308, %v1368
          %v1423 = vmul.f32 %v1310, %v1373
          %v1424 = vmul.f32 %v1312, %v1378
          %v1425 = vmul.f32 %v1314, %v1383
          %v1426 = vmul.f32 %v1316, %v1388
          %v1427 = vmul.f32 %v1318, %v1393
          %v1428 = vmul.f32 %v1320, %v1398
          %v1429 = vmul.f32 %v1322, %v1403
          %v1430 = vmul.f32 %v1324, %v1408
          %v1431 = vmul.f32 %v1326, %v1413
          %v1432 = vmul.f32 %v1328, %v1418
          %1433 = vst [vmem:[%s226] sm:$0xff] %v1420
          %1434 = vst [vmem:[%s226 + $0x8] sm:$0xff] %v1421
          %1435 = vst [vmem:[%s226 + $0x10] sm:$0xff] %v1422
          %1436 = vst [vmem:[%s226 + $0x18] sm:$0xff] %v1423
          %1437 = vst [vmem:[%s226 + $0x20] sm:$0xff] %v1424
          %1438 = vst [vmem:[%s226 + $0x28] sm:$0xff] %v1425
          %1439 = vst [vmem:[%s226 + $0x30] sm:$0xff] %v1426
          %1440 = vst [vmem:[%s226 + $0x38] sm:$0xff] %v1427
          %1441 = vst [vmem:[%s226 + $0x40] sm:$0xff] %v1428
          %1442 = vst [vmem:[%s226 + $0x48] sm:$0xff] %v1429
          %1443 = vst [vmem:[%s226 + $0x50] sm:$0xff] %v1430
          %1444 = vst [vmem:[%s226 + $0x58] sm:$0xff] %v1431
          %1445 = vst [vmem:[%s226 + $0x60] sm:$0xff] %v1432
        $region48: #{recommender_forward.1} parent=35 // pred_fallthru
          _
        %s1446 = sand.u32 %s140, 1
        %s1447 = sand.u32 %s140, 1
        %s1448 = smul.addr %s1447, 104
        %s1449 = scalar_lea.vmem [#allocation5], %s1448
        // Predicated region
        $region49: #{recommender_forward.1} parent=35 // pred_check
          %p1450 = pneg %p150
        $region50: #{recommender_forward.1} parent=35 // pred_check_branch
          %1452 = sbr.rel (%p1450) target = $region52
        $region51: #{recommender_forward.1} parent=35 // pred_region
          %s1453 = smul.u32 %s22, %s21
          %s1454 = smul.u32 13, %s20
          %s1455 = smul.addr %s1454, 2
          %s1456 = sadd.s32 %s1453, %s1455
          %s1457 = smul.addr %s1456, 8
          %s1458 = scalar_lea.vmem %s4, %s1457
          // Predicated region
          $region53: #{recommender_forward.1} parent=51 // pred_check
            _
          $region54: #{recommender_forward.1} parent=51 // pred_check_branch
            %1460 = sbr.rel (0) target = $region56
          $region55: #{recommender_forward.1} parent=51 // pred_region
            // Predicated region
            $region57: #{recommender_forward.1} parent=55 // pred_check
              _
            $region58: #{recommender_forward.1} parent=55 // pred_check_branch
              %1462 = sbr.rel (0) target = $region60
            $region59: #{recommender_forward.1} parent=55 // pred_region
              // Predicated region
              $region72: #{recommender_forward.1} parent=59 // pred_check
                _
              $region73: #{recommender_forward.1} parent=59 // pred_check_branch
                %1501 = sbr.rel (0) target = $region75
              $region74: #{recommender_forward.1} parent=59 // pred_region
                loop: start=0, step=1, limit=1
                $region76: #{recommender_forward.1} parent=74 // loop_pre_header
                  _
                $region77: #{recommender_forward.1} parent=74 // loop_header
                  %s1503 = sphi 0, %s1507
                  %p1504 = scmp.ge.s32.totalorder %s1503, 1
                  %s1508 = sphi %s1449, %s1449
                  %s1509 = sphi %s1458, %s1458
                $region78: #{recommender_forward.1} parent=74 // loop_header_branch
                  %1506 = sbr.rel (%p1504) target = $region82
                $region79: #{recommender_forward.1} parent=74 // loop_body
                  %v1510 = vld [vmem:[%s1508] sm:$0xff]
                  %1511 = vst [vmem:[%s1509] sm:$0xff] %v1510
                  %v1512 = vld [vmem:[%s1508 + $0x8] sm:$0xff]
                  %1513 = vst [vmem:[%s1509 + $0x10] sm:$0xff] %v1512
                  %v1514 = vld [vmem:[%s1508 + $0x10] sm:$0xff]
                  %1515 = vst [vmem:[%s1509 + $0x20] sm:$0xff] %v1514
                  %v1516 = vld [vmem:[%s1508 + $0x18] sm:$0xff]
                  %1517 = vst [vmem:[%s1509 + $0x30] sm:$0xff] %v1516
                  %v1518 = vld [vmem:[%s1508 + $0x20] sm:$0xff]
                  %1519 = vst [vmem:[%s1509 + $0x40] sm:$0xff] %v1518
                  %v1520 = vld [vmem:[%s1508 + $0x28] sm:$0xff]
                  %1521 = vst [vmem:[%s1509 + $0x50] sm:$0xff] %v1520
                  %v1522 = vld [vmem:[%s1508 + $0x30] sm:$0xff]
                  %1523 = vst [vmem:[%s1509 + $0x60] sm:$0xff] %v1522
                  %v1524 = vld [vmem:[%s1508 + $0x38] sm:$0xff]
                  %1525 = vst [vmem:[%s1509 + $0x70] sm:$0xff] %v1524
                  %v1526 = vld [vmem:[%s1508 + $0x40] sm:$0xff]
                  %1527 = vst [vmem:[%s1509 + $0x80] sm:$0xff] %v1526
                  %v1528 = vld [vmem:[%s1508 + $0x48] sm:$0xff]
                  %1529 = vst [vmem:[%s1509 + $0x90] sm:$0xff] %v1528
                  %v1530 = vld [vmem:[%s1508 + $0x50] sm:$0xff]
                  %1531 = vst [vmem:[%s1509 + $0xa0] sm:$0xff] %v1530
                  %v1532 = vld [vmem:[%s1508 + $0x58] sm:$0xff]
                  %1533 = vst [vmem:[%s1509 + $0xb0] sm:$0xff] %v1532
                  %v1534 = vld [vmem:[%s1508 + $0x60] sm:$0xff]
                  %1535 = vst [vmem:[%s1509 + $0xc0] sm:$0xff] %v1534
                $region80: #{recommender_forward.1} parent=74 // loop_footer
                  %s1507 = sadd.s32 1, %s1503
                $region81: #{recommender_forward.1} parent=74 // loop_footer_branch
                  %1502 = sbr.rel target = $region77
                $region82: #{recommender_forward.1} parent=74 // loop_exit
                  _
              $region75: #{recommender_forward.1} parent=59 // pred_fallthru
                _
              // Predicated region
              $region83: #{recommender_forward.1} parent=59 // pred_check
                _
              $region84: #{recommender_forward.1} parent=59 // pred_check_branch
                %1537 = sbr.rel target = $region86
              $region85: #{recommender_forward.1} parent=59 // pred_region
                _
              $region86: #{recommender_forward.1} parent=59 // pred_fallthru
                _
            $region60: #{recommender_forward.1} parent=55 // pred_fallthru
              _
            // Predicated region
            $region61: #{recommender_forward.1} parent=55 // pred_check
              _
            $region62: #{recommender_forward.1} parent=55 // pred_check_branch
              %1464 = sbr.rel target = $region64
            $region63: #{recommender_forward.1} parent=55 // pred_region
              loop: start=0, step=1, limit=1
              $region65: #{recommender_forward.1} parent=63 // loop_pre_header
                _
              $region66: #{recommender_forward.1} parent=63 // loop_header
                %s1467 = sphi 0, %s1471
                %p1468 = scmp.ge.s32.totalorder %s1467, 1
                %s1472 = sphi %s1449, %s1449
                %s1473 = sphi %s1458, %s1458
              $region67: #{recommender_forward.1} parent=63 // loop_header_branch
                %1470 = sbr.rel (%p1468) target = $region71
              $region68: #{recommender_forward.1} parent=63 // loop_body
                %v1474 = vld [vmem:[%s1472] sm:$0xff]
                %1475 = vst [vmem:[%s1473] sm:$0xff] %v1474
                %v1476 = vld [vmem:[%s1472 + $0x8] sm:$0xff]
                %1477 = vst [vmem:[%s1473 + $0x10] sm:$0xff] %v1476
                %v1478 = vld [vmem:[%s1472 + $0x10] sm:$0xff]
                %1479 = vst [vmem:[%s1473 + $0x20] sm:$0xff] %v1478
                %v1480 = vld [vmem:[%s1472 + $0x18] sm:$0xff]
                %1481 = vst [vmem:[%s1473 + $0x30] sm:$0xff] %v1480
                %v1482 = vld [vmem:[%s1472 + $0x20] sm:$0xff]
                %1483 = vst [vmem:[%s1473 + $0x40] sm:$0xff] %v1482
                %v1484 = vld [vmem:[%s1472 + $0x28] sm:$0xff]
                %1485 = vst [vmem:[%s1473 + $0x50] sm:$0xff] %v1484
                %v1486 = vld [vmem:[%s1472 + $0x30] sm:$0xff]
                %1487 = vst [vmem:[%s1473 + $0x60] sm:$0xff] %v1486
                %v1488 = vld [vmem:[%s1472 + $0x38] sm:$0xff]
                %1489 = vst [vmem:[%s1473 + $0x70] sm:$0xff] %v1488
                %v1490 = vld [vmem:[%s1472 + $0x40] sm:$0xff]
                %1491 = vst [vmem:[%s1473 + $0x80] sm:$0xff] %v1490
                %v1492 = vld [vmem:[%s1472 + $0x48] sm:$0xff]
                %1493 = vst [vmem:[%s1473 + $0x90] sm:$0xff] %v1492
                %v1494 = vld [vmem:[%s1472 + $0x50] sm:$0xff]
                %1495 = vst [vmem:[%s1473 + $0xa0] sm:$0xff] %v1494
                %v1496 = vld [vmem:[%s1472 + $0x58] sm:$0xff]
                %1497 = vst [vmem:[%s1473 + $0xb0] sm:$0xff] %v1496
                %v1498 = vld [vmem:[%s1472 + $0x60] sm:$0xff]
                %1499 = vst [vmem:[%s1473 + $0xc0] sm:$0xff] %v1498
              $region69: #{recommender_forward.1} parent=63 // loop_footer
                %s1471 = sadd.s32 1, %s1467
              $region70: #{recommender_forward.1} parent=63 // loop_footer_branch
                %1466 = sbr.rel target = $region66
              $region71: #{recommender_forward.1} parent=63 // loop_exit
                _
            $region64: #{recommender_forward.1} parent=55 // pred_fallthru
              _
          $region56: #{recommender_forward.1} parent=51 // pred_fallthru
            _
          %1538 = vnop
        $region52: #{recommender_forward.1} parent=35 // pred_fallthru
          _
      $region36: #{recommender_forward.1} parent=5 // pred_fallthru
        _
      %p1539 = scmp.le.s32.totalorder 2, %s10
      // Predicated region
      $region87: #{recommender_forward.1} parent=5 // pred_check
        %p1540 = pneg %p1539
      $region88: #{recommender_forward.1} parent=5 // pred_check_branch
        %1542 = sbr.rel (%p1540) target = $region90
      $region89: #{recommender_forward.1} parent=5 // pred_region
        %s1543 = ssub.s32 %s10, 2
        // Predicated region
        $region91: #{recommender_forward.1} parent=89 // pred_check
          %p1544 = pneg %p156
        $region92: #{recommender_forward.1} parent=89 // pred_check_branch
          %1546 = sbr.rel (%p1544) target = $region94
        $region93: #{recommender_forward.1} parent=89 // pred_region
          %s1547 = sand.u32 %s141, 1
          %s1548 = sand.u32 %s141, 1
          %s1549 = smul.addr %s1548, 104
          %s1550 = scalar_lea.vmem [#allocation5], %s1549
        $region94: #{recommender_forward.1} parent=89 // pred_fallthru
          _
      $region90: #{recommender_forward.1} parent=5 // pred_fallthru
        _
    $region6: #{recommender_forward.1} parent=1 // loop_footer
      %s14 = sadd.s32 1, %s10
    $region7: #{recommender_forward.1} parent=1 // loop_footer_branch
      %9 = sbr.rel target = $region3
    $region8: #{recommender_forward.1} parent=1 // loop_exit
      _

</llo_original>
